<compile_context>
chip_gen: v7x
topology: tpu7x:2x2x1
jax: 0.10.0
libtpu: 0.0.40
codegen_flags: <defaults>
</compile_context>

<pallas_src>
import jax
import jax.numpy as jnp
from jax import lax
from jax.experimental import pallas as pl
from jax.experimental.pallas import tpu as pltpu

_LANES = 128


def _round_up(x, m):
    return (x + m - 1) // m * m


def _make_block_kernel(tw):
    """Build the fused kernel with a static W tile size baked in."""

    def kernel(xp_hbm, dww_ref, b1_ref, pww_ref, b2_ref, out_ref, slab_buf, copy_sem):
        # xp_hbm  : (N, H_c+2, W_c+2, Cin_p) padded input, left in HBM (pl.ANY)
        # dww_ref : (9, Cin_p)        depthwise weights (kh*3 + kw), BN1 scale folded in
        # b1_ref  : (1, Cin_p)        folded BN1 bias
        # pww_ref : (Cin_p, Cout_p)   pointwise weights (bf16), BN2 scale folded in
        # b2_ref  : (1, Cout_p)       folded BN2 bias
        # out_ref : (1, TH, W_c, Cout_p)  one H tile of the output
        # slab_buf: (2, TH+2, W_c+2, Cin_p) VMEM double buffer for the input row slab
        # copy_sem: (2,) DMA semaphores
        n = pl.program_id(0)
        h = pl.program_id(1)
        n_h = pl.num_programs(1)

        TH = out_ref.shape[1]
        W_c = out_ref.shape[2]
        Cout_p = out_ref.shape[3]
        Cin_p = slab_buf.shape[3]
        TW = tw

        slot = h % 2

        def _start_fetch(h_idx, s):
            row0 = pl.multiple_of(h_idx * TH, TH)
            pltpu.make_async_copy(
                xp_hbm.at[n, pl.ds(row0, TH + 2)],
                slab_buf.at[s],
                copy_sem.at[s],
            ).start()

        # First H tile of this batch element: fetch its slab now (slot == 0 when h == 0).
        @pl.when(h == 0)
        def _():
            _start_fetch(0, slot)

        # Wait for the slab of the current step (started at step h-1, or just above).
        pltpu.make_async_copy(
            xp_hbm.at[n, pl.ds(0, TH + 2)],
            slab_buf.at[slot],
            copy_sem.at[slot],
        ).wait()

        # Prefetch the next H tile of the same batch element into the other slot,
        # overlapping its DMA with this step's compute.
        @pl.when(h + 1 < n_h)
        def _():
            _start_fetch(h + 1, 1 - slot)

        b1 = b1_ref[0]            # (Cin_p,)
        b2 = b2_ref[0]            # (Cout_p,)
        pww = pww_ref[...]        # (Cin_p, Cout_p) bf16

        def _w_tile(wi):
            if isinstance(wi, int):
                c0 = wi * TW
            else:
                c0 = pl.multiple_of(wi * TW, TW)

            # ---- depthwise 3x3 (stride=1), f32 MAC, accumulator kept in registers ----
            acc = jnp.zeros((TH, TW, Cin_p), jnp.float32)
            for kh in range(3):
                for kw in range(3):
                    tap = slab_buf[slot, pl.ds(kh, TH), pl.ds(c0 + kw, TW), :]
                    acc = acc + tap * dww_ref[kh * 3 + kw]

            # ---- BN1 bias (scale folded into weights) + ReLU ----
            y1 = jnp.maximum(acc + b1, 0.0)                      # (TH, TW, Cin_p)

            # ---- pointwise 1x1 on the MXU (bf16 in, f32 accumulate) ----
            y1 = y1.reshape(TH * TW, Cin_p).astype(jnp.bfloat16)  # TW % 8 == 0 -> free
            out = jnp.dot(y1, pww, preferred_element_type=jnp.float32)

            # ---- BN2 bias + ReLU ----
            out = jnp.maximum(out + b2, 0.0)
            out_ref[0, :, pl.ds(c0, TW), :] = (
                out.reshape(TH, TW, Cout_p).astype(out_ref.dtype))

        n_w_tiles = W_c // TW
        if n_w_tiles == 1:
            _w_tile(0)
        else:
            pl.loop(0, n_w_tiles)(_w_tile)

    return kernel


def mobilenet_block(x_nchw, dw_w, pw_w, bn1, bn2, eps=1e-5, block_h=8,
                    out_dtype=jnp.float32):
    """x_nchw: (N, Cin, H, W) f32.  dw_w: (Cin, 1, 3, 3).  pw_w: (Cout, Cin, 1, 1).
    bn1/bn2: dicts with gamma, beta, mean, var (eval-mode BatchNorm)."""
    N, Cin, H, W = x_nchw.shape
    Cout = pw_w.shape[0]
    Cin_p = _round_up(Cin, _LANES)
    Cout_p = _round_up(Cout, _LANES)

    # ---- spatial tiling ----
    # TH rows per grid step; H padded up to a multiple of TH and W to a multiple of 8 so
    # tile math is exact and reshapes / stores stay sublane/lane aligned.  Extra rows and
    # columns are computed on zero padding and discarded below.
    TH = max(1, min(block_h, H))
    H_c = _round_up(H, TH)
    W_c = _round_up(W, 8)

    # W tile: largest divisor of W_c that is a multiple of 8 and keeps the f32 depthwise
    # accumulator register-resident (TH*TW <= ~256 elems at Cin_p=128 -> <= 32 vregs);
    # this also gives the pointwise matmul an M of up to 256 per MXU call.
    max_tw = max(8, 256 // TH)
    TW = 8
    t = 8
    while t <= min(W_c, max_tw):
        if W_c % t == 0:
            TW = t
        t += 8

    # ---- fold eval-mode BN into conv weights / biases ----
    s1 = bn1["gamma"] / jnp.sqrt(bn1["var"] + eps)
    b1 = bn1["beta"] - bn1["mean"] * s1
    s2 = bn2["gamma"] / jnp.sqrt(bn2["var"] + eps)
    b2 = bn2["beta"] - bn2["mean"] * s2

    # depthwise weights (Cin,1,3,3) -> (3,3,Cin) * s1 -> (9, Cin_p)
    dww = jnp.transpose(dw_w[:, 0, :, :], (1, 2, 0)) * s1
    dww = jnp.pad(dww.reshape(9, Cin), ((0, 0), (0, Cin_p - Cin)))
    # pointwise weights (Cout,Cin,1,1) -> (Cin,Cout) * s2 -> (Cin_p, Cout_p) bf16
    pww = jnp.transpose(pw_w[:, :, 0, 0], (1, 0)) * s2[None, :]
    pww = jnp.pad(pww, ((0, Cin_p - Cin), (0, Cout_p - Cout))).astype(jnp.bfloat16)
    b1p = jnp.pad(b1, (0, Cin_p - Cin)).reshape(1, Cin_p)
    b2p = jnp.pad(b2, (0, Cout_p - Cout)).reshape(1, Cout_p)

    # ---- NCHW -> NHWC; ONE pad op: halo + spatial round-up + channel padding ----
    x = jnp.transpose(x_nchw, (0, 2, 3, 1))                       # (N, H, W, Cin)
    xp = jnp.pad(x, ((0, 0),
                     (1, H_c + 1 - H),
                     (1, W_c + 1 - W),
                     (0, Cin_p - Cin)))                           # (N, H_c+2, W_c+2, Cin_p)

    grid = (N, H_c // TH)

    # explicit scoped-VMEM budget derived from the actual tiles (v7x has only 64 MiB)
    itemsize_out = jnp.dtype(out_dtype).itemsize
    slab_bytes = 2 * (TH + 2) * (W_c + 2) * Cin_p * 4
    out_bytes = 2 * TH * W_c * Cout_p * itemsize_out
    wgt_bytes = 2 * (16 * Cin_p * 4 + 8 * Cin_p * 4 + Cin_p * Cout_p * 2 + 8 * Cout_p * 4)
    vmem_limit = int(min(max(2 * (slab_bytes + out_bytes + wgt_bytes),
                             16 * 1024 * 1024), 64 * 1024 * 1024))

    out = pl.pallas_call(
        _make_block_kernel(TW),
        out_shape=jax.ShapeDtypeStruct((N, H_c, W_c, Cout_p), out_dtype),
        grid_spec=pltpu.PrefetchScalarGridSpec(
            num_scalar_prefetch=0,
            grid=grid,
            in_specs=[
                pl.BlockSpec(memory_space=pl.ANY),                    # input stays in HBM
                pl.BlockSpec((9, Cin_p), lambda n, h: (0, 0)),
                pl.BlockSpec((1, Cin_p), lambda n, h: (0, 0)),
                pl.BlockSpec((Cin_p, Cout_p), lambda n, h: (0, 0)),
                pl.BlockSpec((1, Cout_p), lambda n, h: (0, 0)),
            ],
            out_specs=pl.BlockSpec((1, TH, W_c, Cout_p), lambda n, h: (n, h, 0, 0)),
            scratch_shapes=[
                pltpu.VMEM((2, TH + 2, W_c + 2, Cin_p), jnp.float32),  # slab double buffer
                pltpu.SemaphoreType.DMA((2,)),
            ],
        ),
        compiler_params=pltpu.CompilerParams(
            dimension_semantics=("parallel", "arbitrary"),
            vmem_limit_bytes=vmem_limit),
    )(xp, dww, b1p, pww, b2p)

    # strip spatial/channel padding, NHWC -> NCHW to match the PyTorch convention
    out = out[:, :H, :W, :Cout]
    return jnp.transpose(out, (0, 3, 1, 2))


def _reference(x_nchw, dw_w, pw_w, bn1, bn2, eps=1e-5):
    """Pure-JAX f32 reference (eval-mode BN) for verification."""
    N, Cin, H, W = x_nchw.shape
    x = jnp.transpose(x_nchw, (0, 2, 3, 1))
    dww = jnp.transpose(dw_w[:, 0, :, :], (1, 2, 0))[:, :, None, :]   # (3,3,1,Cin) HWIO
    y = lax.conv_general_dilated(
        x, dww, window_strides=(1, 1), padding=((1, 1), (1, 1)),
        dimension_numbers=("NHWC", "HWIO", "NHWC"), feature_group_count=Cin)
    y = (y - bn1["mean"]) / jnp.sqrt(bn1["var"] + eps) * bn1["gamma"] + bn1["beta"]
    y = jnp.maximum(y, 0.0)
    pww = jnp.transpose(pw_w[:, :, 0, 0], (1, 0))                     # (Cin, Cout)
    z = jnp.einsum("nhwc,cd->nhwd", y, pww)
    z = (z - bn2["mean"]) / jnp.sqrt(bn2["var"] + eps) * bn2["gamma"] + bn2["beta"]
    z = jnp.maximum(z, 0.0)
    return jnp.transpose(z, (0, 3, 1, 2))


if __name__ == "__main__":
    key = jax.random.PRNGKey(0)
    N, Cin, Cout, H, W = 2, 4, 8, 16, 16
    k = jax.random.split(key, 8)

    x = jax.random.normal(k[0], (N, Cin, H, W), jnp.float32)
    dw_w = jax.random.normal(k[1], (Cin, 1, 3, 3), jnp.float32) * 0.2
    pw_w = jax.random.normal(k[2], (Cout, Cin, 1, 1), jnp.float32) * 0.2
    bn1 = dict(gamma=1.0 + 0.1 * jax.random.normal(k[3], (Cin,), jnp.float32),
               beta=0.1 * jax.random.normal(k[4], (Cin,), jnp.float32),
               mean=0.05 * jnp.arange(Cin, dtype=jnp.float32),
               var=1.0 + 0.01 * jnp.arange(Cin, dtype=jnp.float32))
    bn2 = dict(gamma=1.0 + 0.1 * jax.random.normal(k[5], (Cout,), jnp.float32),
               beta=0.1 * jax.random.normal(k[6], (Cout,), jnp.float32),
               mean=0.02 * jnp.arange(Cout, dtype=jnp.float32),
               var=1.0 + 0.01 * jnp.arange(Cout, dtype=jnp.float32))

    out = jax.block_until_ready(mobilenet_block(x, dw_w, pw_w, bn1, bn2))
    ref = jax.block_until_ready(_reference(x, dw_w, pw_w, bn1, bn2))
    assert out.shape == (N, Cout, H, W)
    # tolerance loosened vs. f32 reference: pointwise matmul uses bf16 MXU inputs
    assert jnp.max(jnp.abs(out - ref)) < 2e-2
    print("KERNEL_OK")
</pallas_src>

<mosaic_0001>
module attributes {stable_mosaic.version = 11 : i64} {
  func.func @kernel(%arg0: i32, %arg1: i32, %arg2: memref<2x18x18x128xf32, #tpu.memory_space<any>>, %arg3: memref<9x128xf32, #tpu.memory_space<vmem>>, %arg4: memref<1x128xf32, #tpu.memory_space<vmem>>, %arg5: memref<128x128xbf16, #tpu.memory_space<vmem>>, %arg6: memref<1x128xf32, #tpu.memory_space<vmem>>, %arg7: memref<1x8x16x128xf32, #tpu.memory_space<vmem>>, %arg8: memref<2x10x18x128xf32, #tpu.memory_space<vmem>>, %arg9: memref<2x!tpu.dma_semaphore, #tpu.memory_space<semaphore_mem>>) attributes {dimension_semantics = [#tpu.dimension_semantics<parallel>, #tpu.dimension_semantics<arbitrary>], iteration_bounds = array<i64: 2, 2>, scalar_prefetch = 0 : i64, scratch_operands = 2 : i64, tpu.core_type = #tpu.core_type<tc>, window_params = [{}, {pipeline_mode = #tpu.pipeline_mode<synchronous>, transform_indices = @transform_1, window_bounds = array<i64: 9, 128>}, {pipeline_mode = #tpu.pipeline_mode<synchronous>, transform_indices = @transform_2, window_bounds = array<i64: 1, 128>}, {pipeline_mode = #tpu.pipeline_mode<synchronous>, transform_indices = @transform_3, window_bounds = array<i64: 128, 128>}, {pipeline_mode = #tpu.pipeline_mode<synchronous>, transform_indices = @transform_4, window_bounds = array<i64: 1, 128>}, {transform_indices = @transform_5, window_bounds = array<i64: 1, 8, 16, 128>}]} {
    %c2_i32 = arith.constant 2 : i32
    %c0_i32 = arith.constant 0 : i32
    %0 = arith.cmpi eq, %c2_i32, %c0_i32 : i32
    %c1_i32 = arith.constant 1 : i32
    %1 = arith.select %0, %c1_i32, %c2_i32 : i32
    %2 = arith.remsi %arg1, %1 : i32
    %c0_i32_0 = arith.constant 0 : i32
    %3 = arith.cmpi ne, %2, %c0_i32_0 : i32
    %c0_i32_1 = arith.constant 0 : i32
    %4 = arith.cmpi slt, %2, %c0_i32_1 : i32
    %c0_i32_2 = arith.constant 0 : i32
    %5 = arith.cmpi slt, %1, %c0_i32_2 : i32
    %6 = arith.xori %4, %5 : i1
    %7 = arith.andi %6, %3 : i1
    %8 = arith.addi %2, %1 : i32
    %9 = arith.select %7, %8, %2 : i32
    %c0_i32_3 = arith.constant 0 : i32
    %10 = arith.cmpi eq, %arg1, %c0_i32_3 : i32
    %11 = arith.extui %10 : i1 to i32
    %c0_i32_4 = arith.constant 0 : i32
    %12 = arith.cmpi ne, %11, %c0_i32_4 : i32
    scf.if %12 {
      %c0_i32_63 = arith.constant 0 : i32
      %127 = tpu.assume_multiple %c0_i32_63, 8 : i32
      %c0_i32_64 = arith.constant 0 : i32
      %c0_i32_65 = arith.constant 0 : i32
      %128 = tpu.memref_slice %arg2[%arg0, %127, %c0_i32_64, %c0_i32_65] : memref<2x18x18x128xf32, #tpu.memory_space<any>> -> memref<1x10x18x128xf32, #tpu.memory_space<any>>
      %129 = tpu.memref_squeeze %128 : memref<1x10x18x128xf32, #tpu.memory_space<any>> -> memref<10x18x128xf32, #tpu.memory_space<any>>
      %c0_i32_66 = arith.constant 0 : i32
      %c0_i32_67 = arith.constant 0 : i32
      %c0_i32_68 = arith.constant 0 : i32
      %130 = tpu.memref_slice %arg8[%9, %c0_i32_66, %c0_i32_67, %c0_i32_68] : memref<2x10x18x128xf32, #tpu.memory_space<vmem>> -> memref<1x10x18x128xf32, #tpu.memory_space<vmem>>
      %131 = tpu.memref_squeeze %130 : memref<1x10x18x128xf32, #tpu.memory_space<vmem>> -> memref<10x18x128xf32, #tpu.memory_space<vmem>>
      %132 = tpu.memref_slice %arg9[%9] : memref<2x!tpu.dma_semaphore, #tpu.memory_space<semaphore_mem>> -> memref<1x!tpu.dma_semaphore, #tpu.memory_space<semaphore_mem>>
      %133 = tpu.memref_squeeze %132 : memref<1x!tpu.dma_semaphore, #tpu.memory_space<semaphore_mem>> -> memref<!tpu.dma_semaphore, #tpu.memory_space<semaphore_mem>>
      tpu.enqueue_dma source(%129 : memref<10x18x128xf32, #tpu.memory_space<any>>) target(%131 : memref<10x18x128xf32, #tpu.memory_space<vmem>>) target_semaphore(%133 : memref<!tpu.dma_semaphore, #tpu.memory_space<semaphore_mem>>)
    } else {
    }
    %c0_i32_5 = arith.constant 0 : i32
    %c0_i32_6 = arith.constant 0 : i32
    %c0_i32_7 = arith.constant 0 : i32
    %13 = tpu.memref_slice %arg2[%arg0, %c0_i32_5, %c0_i32_6, %c0_i32_7] : memref<2x18x18x128xf32, #tpu.memory_space<any>> -> memref<1x10x18x128xf32, #tpu.memory_space<any>>
    %14 = tpu.memref_squeeze %13 : memref<1x10x18x128xf32, #tpu.memory_space<any>> -> memref<10x18x128xf32, #tpu.memory_space<any>>
    %c0_i32_8 = arith.constant 0 : i32
    %c0_i32_9 = arith.constant 0 : i32
    %c0_i32_10 = arith.constant 0 : i32
    %15 = tpu.memref_slice %arg8[%9, %c0_i32_8, %c0_i32_9, %c0_i32_10] : memref<2x10x18x128xf32, #tpu.memory_space<vmem>> -> memref<1x10x18x128xf32, #tpu.memory_space<vmem>>
    %16 = tpu.memref_squeeze %15 : memref<1x10x18x128xf32, #tpu.memory_space<vmem>> -> memref<10x18x128xf32, #tpu.memory_space<vmem>>
    %17 = tpu.memref_slice %arg9[%9] : memref<2x!tpu.dma_semaphore, #tpu.memory_space<semaphore_mem>> -> memref<1x!tpu.dma_semaphore, #tpu.memory_space<semaphore_mem>>
    %18 = tpu.memref_squeeze %17 : memref<1x!tpu.dma_semaphore, #tpu.memory_space<semaphore_mem>> -> memref<!tpu.dma_semaphore, #tpu.memory_space<semaphore_mem>>
    tpu.wait_dma2 semaphore(%18 : memref<!tpu.dma_semaphore, #tpu.memory_space<semaphore_mem>>) src(%14 : memref<10x18x128xf32, #tpu.memory_space<any>>) dst(%16 : memref<10x18x128xf32, #tpu.memory_space<vmem>>)
    %c1_i32_11 = arith.constant 1 : i32
    %19 = arith.addi %arg1, %c1_i32_11 : i32
    %c2_i32_12 = arith.constant 2 : i32
    %20 = arith.cmpi slt, %19, %c2_i32_12 : i32
    %21 = arith.extui %20 : i1 to i32
    %c0_i32_13 = arith.constant 0 : i32
    %22 = arith.cmpi ne, %21, %c0_i32_13 : i32
    scf.if %22 {
      %c1_i32_63 = arith.constant 1 : i32
      %127 = arith.addi %arg1, %c1_i32_63 : i32
      %c1_i32_64 = arith.constant 1 : i32
      %128 = arith.subi %c1_i32_64, %9 : i32
      %c8_i32 = arith.constant 8 : i32
      %129 = arith.muli %127, %c8_i32 : i32
      %130 = tpu.assume_multiple %129, 8 : i32
      %c0_i32_65 = arith.constant 0 : i32
      %c0_i32_66 = arith.constant 0 : i32
      %131 = tpu.memref_slice %arg2[%arg0, %130, %c0_i32_65, %c0_i32_66] : memref<2x18x18x128xf32, #tpu.memory_space<any>> -> memref<1x10x18x128xf32, #tpu.memory_space<any>>
      %132 = tpu.memref_squeeze %131 : memref<1x10x18x128xf32, #tpu.memory_space<any>> -> memref<10x18x128xf32, #tpu.memory_space<any>>
      %c0_i32_67 = arith.constant 0 : i32
      %c0_i32_68 = arith.constant 0 : i32
      %c0_i32_69 = arith.constant 0 : i32
      %133 = tpu.memref_slice %arg8[%128, %c0_i32_67, %c0_i32_68, %c0_i32_69] : memref<2x10x18x128xf32, #tpu.memory_space<vmem>> -> memref<1x10x18x128xf32, #tpu.memory_space<vmem>>
      %134 = tpu.memref_squeeze %133 : memref<1x10x18x128xf32, #tpu.memory_space<vmem>> -> memref<10x18x128xf32, #tpu.memory_space<vmem>>
      %135 = tpu.memref_slice %arg9[%128] : memref<2x!tpu.dma_semaphore, #tpu.memory_space<semaphore_mem>> -> memref<1x!tpu.dma_semaphore, #tpu.memory_space<semaphore_mem>>
      %136 = tpu.memref_squeeze %135 : memref<1x!tpu.dma_semaphore, #tpu.memory_space<semaphore_mem>> -> memref<!tpu.dma_semaphore, #tpu.memory_space<semaphore_mem>>
      tpu.enqueue_dma source(%132 : memref<10x18x128xf32, #tpu.memory_space<any>>) target(%134 : memref<10x18x128xf32, #tpu.memory_space<vmem>>) target_semaphore(%136 : memref<!tpu.dma_semaphore, #tpu.memory_space<semaphore_mem>>)
    } else {
    }
    %c0 = arith.constant 0 : index
    %c0_14 = arith.constant 0 : index
    %23 = vector.load %arg4[%c0, %c0_14] : memref<1x128xf32, #tpu.memory_space<vmem>>, vector<1x128xf32>
    %24 = vector.shape_cast %23 : vector<1x128xf32> to vector<128xf32>
    %c0_15 = arith.constant 0 : index
    %c0_16 = arith.constant 0 : index
    %25 = vector.load %arg6[%c0_15, %c0_16] : memref<1x128xf32, #tpu.memory_space<vmem>>, vector<1x128xf32>
    %26 = vector.shape_cast %25 : vector<1x128xf32> to vector<128xf32>
    %c0_17 = arith.constant 0 : index
    %c0_18 = arith.constant 0 : index
    %27 = vector.load %arg5[%c0_17, %c0_18] : memref<128x128xbf16, #tpu.memory_space<vmem>>, vector<128x128xbf16>
    %cst = arith.constant 0.000000e+00 : f32
    %28 = vector.broadcast %cst : f32 to vector<8x16x128xf32>
    %29 = arith.index_cast %9 : i32 to index
    %c0_19 = arith.constant 0 : index
    %c0_20 = arith.constant 0 : index
    %c0_21 = arith.constant 0 : index
    %30 = vector.load %arg8[%29, %c0_19, %c0_20, %c0_21] : memref<2x10x18x128xf32, #tpu.memory_space<vmem>>, vector<1x8x16x128xf32>
    %31 = vector.shape_cast %30 : vector<1x8x16x128xf32> to vector<8x16x128xf32>
    %c0_22 = arith.constant 0 : index
    %c0_23 = arith.constant 0 : index
    %32 = vector.load %arg3[%c0_22, %c0_23] : memref<9x128xf32, #tpu.memory_space<vmem>>, vector<1x128xf32>
    %33 = vector.shape_cast %32 : vector<1x128xf32> to vector<128xf32>
    %34 = vector.shape_cast %33 : vector<128xf32> to vector<1x1x128xf32>
    %35 = vector.broadcast %34 : vector<1x1x128xf32> to vector<8x16x128xf32>
    %36 = arith.mulf %31, %35 : vector<8x16x128xf32>
    %37 = arith.addf %28, %36 : vector<8x16x128xf32>
    %38 = arith.index_cast %9 : i32 to index
    %c0_24 = arith.constant 0 : index
    %c1 = arith.constant 1 : index
    %c0_25 = arith.constant 0 : index
    %39 = vector.load %arg8[%38, %c0_24, %c1, %c0_25] : memref<2x10x18x128xf32, #tpu.memory_space<vmem>>, vector<1x8x16x128xf32>
    %40 = vector.shape_cast %39 : vector<1x8x16x128xf32> to vector<8x16x128xf32>
    %c1_26 = arith.constant 1 : index
    %c0_27 = arith.constant 0 : index
    %41 = vector.load %arg3[%c1_26, %c0_27] : memref<9x128xf32, #tpu.memory_space<vmem>>, vector<1x128xf32>
    %42 = vector.shape_cast %41 : vector<1x128xf32> to vector<128xf32>
    %43 = vector.shape_cast %42 : vector<128xf32> to vector<1x1x128xf32>
    %44 = vector.broadcast %43 : vector<1x1x128xf32> to vector<8x16x128xf32>
    %45 = arith.mulf %40, %44 : vector<8x16x128xf32>
    %46 = arith.addf %37, %45 : vector<8x16x128xf32>
    %47 = arith.index_cast %9 : i32 to index
    %c0_28 = arith.constant 0 : index
    %c2 = arith.constant 2 : index
    %c0_29 = arith.constant 0 : index
    %48 = vector.load %arg8[%47, %c0_28, %c2, %c0_29] : memref<2x10x18x128xf32, #tpu.memory_space<vmem>>, vector<1x8x16x128xf32>
    %49 = vector.shape_cast %48 : vector<1x8x16x128xf32> to vector<8x16x128xf32>
    %c2_30 = arith.constant 2 : index
    %c0_31 = arith.constant 0 : index
    %50 = vector.load %arg3[%c2_30, %c0_31] : memref<9x128xf32, #tpu.memory_space<vmem>>, vector<1x128xf32>
    %51 = vector.shape_cast %50 : vector<1x128xf32> to vector<128xf32>
    %52 = vector.shape_cast %51 : vector<128xf32> to vector<1x1x128xf32>
    %53 = vector.broadcast %52 : vector<1x1x128xf32> to vector<8x16x128xf32>
    %54 = arith.mulf %49, %53 : vector<8x16x128xf32>
    %55 = arith.addf %46, %54 : vector<8x16x128xf32>
    %56 = arith.index_cast %9 : i32 to index
    %c1_32 = arith.constant 1 : index
    %c0_33 = arith.constant 0 : index
    %c0_34 = arith.constant 0 : index
    %57 = vector.load %arg8[%56, %c1_32, %c0_33, %c0_34] : memref<2x10x18x128xf32, #tpu.memory_space<vmem>>, vector<1x8x16x128xf32>
    %58 = vector.shape_cast %57 : vector<1x8x16x128xf32> to vector<8x16x128xf32>
    %c3 = arith.constant 3 : index
    %c0_35 = arith.constant 0 : index
    %59 = vector.load %arg3[%c3, %c0_35] : memref<9x128xf32, #tpu.memory_space<vmem>>, vector<1x128xf32>
    %60 = vector.shape_cast %59 : vector<1x128xf32> to vector<128xf32>
    %61 = vector.shape_cast %60 : vector<128xf32> to vector<1x1x128xf32>
    %62 = vector.broadcast %61 : vector<1x1x128xf32> to vector<8x16x128xf32>
    %63 = arith.mulf %58, %62 : vector<8x16x128xf32>
    %64 = arith.addf %55, %63 : vector<8x16x128xf32>
    %65 = arith.index_cast %9 : i32 to index
    %c1_36 = arith.constant 1 : index
    %c1_37 = arith.constant 1 : index
    %c0_38 = arith.constant 0 : index
    %66 = vector.load %arg8[%65, %c1_36, %c1_37, %c0_38] : memref<2x10x18x128xf32, #tpu.memory_space<vmem>>, vector<1x8x16x128xf32>
    %67 = vector.shape_cast %66 : vector<1x8x16x128xf32> to vector<8x16x128xf32>
    %c4 = arith.constant 4 : index
    %c0_39 = arith.constant 0 : index
    %68 = vector.load %arg3[%c4, %c0_39] : memref<9x128xf32, #tpu.memory_space<vmem>>, vector<1x128xf32>
    %69 = vector.shape_cast %68 : vector<1x128xf32> to vector<128xf32>
    %70 = vector.shape_cast %69 : vector<128xf32> to vector<1x1x128xf32>
    %71 = vector.broadcast %70 : vector<1x1x128xf32> to vector<8x16x128xf32>
    %72 = arith.mulf %67, %71 : vector<8x16x128xf32>
    %73 = arith.addf %64, %72 : vector<8x16x128xf32>
    %74 = arith.index_cast %9 : i32 to index
    %c1_40 = arith.constant 1 : index
    %c2_41 = arith.constant 2 : index
    %c0_42 = arith.constant 0 : index
    %75 = vector.load %arg8[%74, %c1_40, %c2_41, %c0_42] : memref<2x10x18x128xf32, #tpu.memory_space<vmem>>, vector<1x8x16x128xf32>
    %76 = vector.shape_cast %75 : vector<1x8x16x128xf32> to vector<8x16x128xf32>
    %c5 = arith.constant 5 : index
    %c0_43 = arith.constant 0 : index
    %77 = vector.load %arg3[%c5, %c0_43] : memref<9x128xf32, #tpu.memory_space<vmem>>, vector<1x128xf32>
    %78 = vector.shape_cast %77 : vector<1x128xf32> to vector<128xf32>
    %79 = vector.shape_cast %78 : vector<128xf32> to vector<1x1x128xf32>
    %80 = vector.broadcast %79 : vector<1x1x128xf32> to vector<8x16x128xf32>
    %81 = arith.mulf %76, %80 : vector<8x16x128xf32>
    %82 = arith.addf %73, %81 : vector<8x16x128xf32>
    %83 = arith.index_cast %9 : i32 to index
    %c2_44 = arith.constant 2 : index
    %c0_45 = arith.constant 0 : index
    %c0_46 = arith.constant 0 : index
    %84 = vector.load %arg8[%83, %c2_44, %c0_45, %c0_46] : memref<2x10x18x128xf32, #tpu.memory_space<vmem>>, vector<1x8x16x128xf32>
    %85 = vector.shape_cast %84 : vector<1x8x16x128xf32> to vector<8x16x128xf32>
    %c6 = arith.constant 6 : index
    %c0_47 = arith.constant 0 : index
    %86 = vector.load %arg3[%c6, %c0_47] : memref<9x128xf32, #tpu.memory_space<vmem>>, vector<1x128xf32>
    %87 = vector.shape_cast %86 : vector<1x128xf32> to vector<128xf32>
    %88 = vector.shape_cast %87 : vector<128xf32> to vector<1x1x128xf32>
    %89 = vector.broadcast %88 : vector<1x1x128xf32> to vector<8x16x128xf32>
    %90 = arith.mulf %85, %89 : vector<8x16x128xf32>
    %91 = arith.addf %82, %90 : vector<8x16x128xf32>
    %92 = arith.index_cast %9 : i32 to index
    %c2_48 = arith.constant 2 : index
    %c1_49 = arith.constant 1 : index
    %c0_50 = arith.constant 0 : index
    %93 = vector.load %arg8[%92, %c2_48, %c1_49, %c0_50] : memref<2x10x18x128xf32, #tpu.memory_space<vmem>>, vector<1x8x16x128xf32>
    %94 = vector.shape_cast %93 : vector<1x8x16x128xf32> to vector<8x16x128xf32>
    %c7 = arith.constant 7 : index
    %c0_51 = arith.constant 0 : index
    %95 = vector.load %arg3[%c7, %c0_51] : memref<9x128xf32, #tpu.memory_space<vmem>>, vector<1x128xf32>
    %96 = vector.shape_cast %95 : vector<1x128xf32> to vector<128xf32>
    %97 = vector.shape_cast %96 : vector<128xf32> to vector<1x1x128xf32>
    %98 = vector.broadcast %97 : vector<1x1x128xf32> to vector<8x16x128xf32>
    %99 = arith.mulf %94, %98 : vector<8x16x128xf32>
    %100 = arith.addf %91, %99 : vector<8x16x128xf32>
    %101 = arith.index_cast %9 : i32 to index
    %c2_52 = arith.constant 2 : index
    %c2_53 = arith.constant 2 : index
    %c0_54 = arith.constant 0 : index
    %102 = vector.load %arg8[%101, %c2_52, %c2_53, %c0_54] : memref<2x10x18x128xf32, #tpu.memory_space<vmem>>, vector<1x8x16x128xf32>
    %103 = vector.shape_cast %102 : vector<1x8x16x128xf32> to vector<8x16x128xf32>
    %c8 = arith.constant 8 : index
    %c0_55 = arith.constant 0 : index
    %104 = vector.load %arg3[%c8, %c0_55] : memref<9x128xf32, #tpu.memory_space<vmem>>, vector<1x128xf32>
    %105 = vector.shape_cast %104 : vector<1x128xf32> to vector<128xf32>
    %106 = vector.shape_cast %105 : vector<128xf32> to vector<1x1x128xf32>
    %107 = vector.broadcast %106 : vector<1x1x128xf32> to vector<8x16x128xf32>
    %108 = arith.mulf %103, %107 : vector<8x16x128xf32>
    %109 = arith.addf %100, %108 : vector<8x16x128xf32>
    %110 = vector.shape_cast %24 : vector<128xf32> to vector<1x1x128xf32>
    %111 = vector.broadcast %110 : vector<1x1x128xf32> to vector<8x16x128xf32>
    %112 = arith.addf %109, %111 : vector<8x16x128xf32>
    %cst_56 = arith.constant 0.000000e+00 : f32
    %113 = vector.broadcast %cst_56 : f32 to vector<8x16x128xf32>
    %114 = arith.maximumf %112, %113 : vector<8x16x128xf32>
    %115 = vector.shape_cast %114 : vector<8x16x128xf32> to vector<128x128xf32>
    %116 = arith.truncf %115 : vector<128x128xf32> to vector<128x128xbf16>
    %cst_57 = arith.constant dense<0.000000e+00> : vector<128x128xf32>
    %117 = tpu.matmul %116, %27, %cst_57 {dimension_numbers = #tpu.dot_dimension_numbers<[1], [0], [0], [1], [0, 0, 1, 1], [], []>} : vector<128x128xbf16>, vector<128x128xbf16>, vector<128x128xf32> -> vector<128x128xf32>
    %118 = vector.shape_cast %26 : vector<128xf32> to vector<1x128xf32>
    %119 = vector.broadcast %118 : vector<1x128xf32> to vector<128x128xf32>
    %120 = arith.addf %117, %119 : vector<128x128xf32>
    %cst_58 = arith.constant 0.000000e+00 : f32
    %121 = vector.broadcast %cst_58 : f32 to vector<128x128xf32>
    %122 = arith.maximumf %120, %121 : vector<128x128xf32>
    %123 = vector.shape_cast %122 : vector<128x128xf32> to vector<8x16x128xf32>
    %c0_59 = arith.constant 0 : index
    %c0_60 = arith.constant 0 : index
    %c0_61 = arith.constant 0 : index
    %c0_62 = arith.constant 0 : index
    %124 = vector.load %arg7[%c0_59, %c0_60, %c0_61, %c0_62] : memref<1x8x16x128xf32, #tpu.memory_space<vmem>>, vector<1x8x16x128xf32>
    %125 = vector.shape_cast %124 : vector<1x8x16x128xf32> to vector<8x16x128xf32>
    %126 = vector.shape_cast %123 : vector<8x16x128xf32> to vector<1x8x16x128xf32>
    tpu.vector_store %arg7[%c0_59, %c0_60, %c0_61, %c0_62], %126 {strides = array<i32>} : memref<1x8x16x128xf32, #tpu.memory_space<vmem>>, vector<1x8x16x128xf32>,
    return
  }
  func.func @transform_1(%arg0: i32, %arg1: i32) -> (i32, i32) {
    %c0_i32 = arith.constant 0 : i32
    %c0_i32_0 = arith.constant 0 : i32
    %c0_i32_1 = arith.constant 0 : i32
    return %c0_i32, %c0_i32_0 : i32, i32
  }
  func.func @transform_2(%arg0: i32, %arg1: i32) -> (i32, i32) {
    %c0_i32 = arith.constant 0 : i32
    %c0_i32_0 = arith.constant 0 : i32
    %c0_i32_1 = arith.constant 0 : i32
    return %c0_i32, %c0_i32_0 : i32, i32
  }
  func.func @transform_3(%arg0: i32, %arg1: i32) -> (i32, i32) {
    %c0_i32 = arith.constant 0 : i32
    %c0_i32_0 = arith.constant 0 : i32
    %c0_i32_1 = arith.constant 0 : i32
    return %c0_i32, %c0_i32_0 : i32, i32
  }
  func.func @transform_4(%arg0: i32, %arg1: i32) -> (i32, i32) {
    %c0_i32 = arith.constant 0 : i32
    %c0_i32_0 = arith.constant 0 : i32
    %c0_i32_1 = arith.constant 0 : i32
    return %c0_i32, %c0_i32_0 : i32, i32
  }
  func.func @transform_5(%arg0: i32, %arg1: i32) -> (i32, i32, i32, i32) {
    %c0_i32 = arith.constant 0 : i32
    %c0_i32_0 = arith.constant 0 : i32
    %c0_i32_1 = arith.constant 0 : i32
    return %arg0, %arg1, %c0_i32, %c0_i32_0 : i32, i32, i32, i32
  }
}

</mosaic_0001>

<llo_original>
// kernel: tpu_custom_call.1
$region0: #{tpu_custom_call.1}
  #allocation0 [shape = 'u32[]', space=smem, size = 0x4, offset = 0x4, fixed_abs, tag = 'smem constant byte address 0x4 - core index']
  #allocation1 [shape = 'u32[144,128]{1,0:T(1,128)}', space=vmem, size = 0x12000, scoped, tag = 'internal scratch']
  #allocation2 [shape = 'f32[2,10,18,128]{3,2,1,0:T(8,128)}', space=vmem, size = 0x3c000, scoped, tag = 'scratch operand']
  #allocation3 [shape = 's32[2]{0}', space=sflag, size = 0x8, scoped, tag = 'scratch operand']
  #allocation6 [shape = 's32[]', space=sflag, size = 0x4, offset = 0, fixed_abs, tag = 'sflag constant byte address 0x0 - dummy sync flag']
  #allocation7 [shape = 's32[]', space=sflag, size = 0x4, offset = 0, fixed_abs, tag = 'sflag constant byte address 0x0 - dummy sync flag']
  %s0 = inlined_call_operand.vmem [shape: f32[2,18,18,128], index: 0, kind: input, shape index: {}]
  %s1 = inlined_call_operand.vmem [shape: f32[9,128], index: 1, kind: input, shape index: {}]
  %s2 = inlined_call_operand.vmem [shape: f32[1,128], index: 2, kind: input, shape index: {}]
  %s3 = inlined_call_operand.vmem [shape: bf16[128,128], index: 3, kind: input, shape index: {}]
  %s4 = inlined_call_operand.vmem [shape: f32[1,128], index: 4, kind: input, shape index: {}]
  %s5 = inlined_call_operand.hbm [shape: f32[2,16,16,128], index: 5, kind: output, shape index: {}]
  %s6 = sld [smem:[#allocation0]]
  $region131: #{tpu_custom_call.1} parent=0
    _
  %s8 = ssub.s32 1, %s6
  %s9 = scalar_select 0, %s8, %s6
  $region1: #{tpu_custom_call.1} parent=0
    #allocation4 [shape = 'u8[131072]{0}', space=vmem, size = 0x20000, scoped, tag = 'output window, operand 0']
    #allocation5 [shape = 's32[2]{0}', space=sflag, size = 0x8, scoped, tag = 'scoped memory for tpu_custom_call.1']
    %10 = vsyncpa [#allocation5], 0
    %s11 = scalar_lea.sflag [#allocation5], 1
    %12 = vsyncpa %s11, 0
    loop: start=0, step=1, limit=6
    $region2: #{tpu_custom_call.1} parent=1 // loop_pre_header
      _
    $region3: #{tpu_custom_call.1} parent=1 // loop_header
      %s14 = sphi 0, %s18
      %p15 = scmp.ge.s32.totalorder %s14, 6
      %s21 = sphi 0, %s33
      %s22 = sphi 0, %s29
      %s23 = sphi 0, %s21
      %s24 = sphi 0, %s22
      %s25 = sphi 0, %s23
      %s26 = sphi 0, %s24
      %s34 = sphi 0, %s34
      %s36 = sphi 0, %s34
      %s37 = sphi 0, %s36
      %s51 = sphi 0, %s37
      %s55 = sphi 0, %s55
      %s57 = sphi 0, %s55
      %s58 = sphi 0, %s57
      %s72 = sphi 0, %s58
      %s76 = sphi 0, %s76
      %s78 = sphi 0, %s76
      %s79 = sphi 0, %s78
      %s93 = sphi 0, %s79
      %s97 = sphi 0, %s97
      %s99 = sphi 0, %s97
      %s100 = sphi 0, %s99
      %s114 = sphi 0, %s100
      %s122 = sphi 0, %s124
      %s125 = sphi 0, %s122
      %s126 = sphi 0, %s125
      %s142 = sphi 0, %s126
    $region4: #{tpu_custom_call.1} parent=1 // loop_header_branch
      %17 = sbr.rel (%p15) target = $region8
    $region5: #{tpu_custom_call.1} parent=1 // loop_body
      %s19 = ssub.s32 %s14, 1
      %s20 = ssub.s32 %s14, 2
      %s27 = sadd.s32 1, %s22
      %p28 = scmp.ge.s32.totalorder %s27, 2
      %s29 = scalar_select %p28, 0, %s27
      %s30 = sadd.s32 1, %s21
      %s31 = scalar_select %p28, %s30, %s21
      %p32 = scmp.ge.s32.totalorder %s31, 2
      %s33 = scalar_select %p32, 0, %s31
      %s35 = sadd.s32 %s34, 1
      %p38 = scmp.eq.s32.totalorder %s14, 3
      %p39 = scmp.ne.s32.totalorder %s34, %s36
      %p40 = scmp.eq.s32.totalorder %s14, 0
      %p41 = por %p39, %p40
      %p42 = scmp.ne.s32.totalorder %s34, %s36
      %p43 = scmp.eq.s32.totalorder %s19, 3
      %p44 = por %p42, %p43
      %p45 = scmp.ne.s32.totalorder %s36, %s37
      %p46 = scmp.eq.s32.totalorder %s19, 0
      %p47 = por %p45, %p46
      %p48 = scmp.ne.s32.totalorder %s36, %s37
      %p49 = scmp.eq.s32.totalorder %s20, 3
      %p50 = por %p48, %p49
      %p52 = scmp.ne.s32.totalorder %s37, %s51
      %p53 = scmp.eq.s32.totalorder %s20, 0
      %p54 = por %p52, %p53
      %s56 = sadd.s32 %s55, 1
      %p59 = scmp.eq.s32.totalorder %s14, 3
      %p60 = scmp.ne.s32.totalorder %s55, %s57
      %p61 = scmp.eq.s32.totalorder %s14, 0
      %p62 = por %p60, %p61
      %p63 = scmp.ne.s32.totalorder %s55, %s57
      %p64 = scmp.eq.s32.totalorder %s19, 3
      %p65 = por %p63, %p64
      %p66 = scmp.ne.s32.totalorder %s57, %s58
      %p67 = scmp.eq.s32.totalorder %s19, 0
      %p68 = por %p66, %p67
      %p69 = scmp.ne.s32.totalorder %s57, %s58
      %p70 = scmp.eq.s32.totalorder %s20, 3
      %p71 = por %p69, %p70
      %p73 = scmp.ne.s32.totalorder %s58, %s72
      %p74 = scmp.eq.s32.totalorder %s20, 0
      %p75 = por %p73, %p74
      %s77 = sadd.s32 %s76, 1
      %p80 = scmp.eq.s32.totalorder %s14, 3
      %p81 = scmp.ne.s32.totalorder %s76, %s78
      %p82 = scmp.eq.s32.totalorder %s14, 0
      %p83 = por %p81, %p82
      %p84 = scmp.ne.s32.totalorder %s76, %s78
      %p85 = scmp.eq.s32.totalorder %s19, 3
      %p86 = por %p84, %p85
      %p87 = scmp.ne.s32.totalorder %s78, %s79
      %p88 = scmp.eq.s32.totalorder %s19, 0
      %p89 = por %p87, %p88
      %p90 = scmp.ne.s32.totalorder %s78, %s79
      %p91 = scmp.eq.s32.totalorder %s20, 3
      %p92 = por %p90, %p91
      %p94 = scmp.ne.s32.totalorder %s79, %s93
      %p95 = scmp.eq.s32.totalorder %s20, 0
      %p96 = por %p94, %p95
      %s98 = sadd.s32 %s97, 1
      %p101 = scmp.eq.s32.totalorder %s14, 3
      %p102 = scmp.ne.s32.totalorder %s97, %s99
      %p103 = scmp.eq.s32.totalorder %s14, 0
      %p104 = por %p102, %p103
      %p105 = scmp.ne.s32.totalorder %s97, %s99
      %p106 = scmp.eq.s32.totalorder %s19, 3
      %p107 = por %p105, %p106
      %p108 = scmp.ne.s32.totalorder %s99, %s100
      %p109 = scmp.eq.s32.totalorder %s19, 0
      %p110 = por %p108, %p109
      %p111 = scmp.ne.s32.totalorder %s99, %s100
      %p112 = scmp.eq.s32.totalorder %s20, 3
      %p113 = por %p111, %p112
      %p115 = scmp.ne.s32.totalorder %s100, %s114
      %p116 = scmp.eq.s32.totalorder %s20, 0
      %p117 = por %p115, %p116
      %s118 = ssub.s32 %s21, %s33
      %s119 = ssub.s32 %s22, %s29
      %s120 = sor.u32 %s118, %s119
      %p121 = scmp.eq.s32.totalorder %s120, 0
      %s123 = sadd.s32 %s122, 1
      %s124 = scalar_select %p121, %s122, %s123
      %p127 = pneg %p121
      %p128 = scmp.eq.s32.totalorder %s14, 3
      %p129 = por %p127, %p128
      %p130 = scmp.ne.s32.totalorder %s122, %s125
      %p131 = scmp.eq.s32.totalorder %s14, 0
      %p132 = por %p130, %p131
      %p133 = scmp.ne.s32.totalorder %s122, %s125
      %p134 = scmp.eq.s32.totalorder %s19, 3
      %p135 = por %p133, %p134
      %p136 = scmp.ne.s32.totalorder %s125, %s126
      %p137 = scmp.eq.s32.totalorder %s19, 0
      %p138 = por %p136, %p137
      %p139 = scmp.ne.s32.totalorder %s125, %s126
      %p140 = scmp.eq.s32.totalorder %s20, 3
      %p141 = por %p139, %p140
      %p143 = scmp.ne.s32.totalorder %s126, %s142
      %p144 = scmp.eq.s32.totalorder %s20, 0
      %p145 = por %p143, %p144
      %p146 = scmp.le.s32.totalorder 1, %s14
      %p147 = scmp.lt.s32.totalorder %s14, 5
      %p148 = pnand %p146, %p147
      %p149 = pneg %p148
      // Predicated region
      $region9: #{tpu_custom_call.1} parent=5 // pred_check
        _
      $region10: #{tpu_custom_call.1} parent=5 // pred_check_branch
        %151 = sbr.rel (%p148) target = $region12
      $region11: #{tpu_custom_call.1} parent=5 // pred_region
        %s152 = ssub.s32 %s14, 1
        // Predicated region
        $region13: #{tpu_custom_call.1} parent=11 // pred_check
          %p153 = pneg %p47
        $region14: #{tpu_custom_call.1} parent=11 // pred_check_branch
          %155 = sbr.rel (%p153) target = $region16
        $region15: #{tpu_custom_call.1} parent=11 // pred_region
          _
        $region16: #{tpu_custom_call.1} parent=11 // pred_fallthru
          _
        // Predicated region
        $region17: #{tpu_custom_call.1} parent=11 // pred_check
          %p156 = pneg %p68
        $region18: #{tpu_custom_call.1} parent=11 // pred_check_branch
          %158 = sbr.rel (%p156) target = $region20
        $region19: #{tpu_custom_call.1} parent=11 // pred_region
          _
        $region20: #{tpu_custom_call.1} parent=11 // pred_fallthru
          _
        // Predicated region
        $region21: #{tpu_custom_call.1} parent=11 // pred_check
          %p159 = pneg %p89
        $region22: #{tpu_custom_call.1} parent=11 // pred_check_branch
          %161 = sbr.rel (%p159) target = $region24
        $region23: #{tpu_custom_call.1} parent=11 // pred_region
          _
        $region24: #{tpu_custom_call.1} parent=11 // pred_fallthru
          _
        // Predicated region
        $region25: #{tpu_custom_call.1} parent=11 // pred_check
          %p162 = pneg %p110
        $region26: #{tpu_custom_call.1} parent=11 // pred_check_branch
          %164 = sbr.rel (%p162) target = $region28
        $region27: #{tpu_custom_call.1} parent=11 // pred_region
          _
        $region28: #{tpu_custom_call.1} parent=11 // pred_fallthru
          _
      $region12: #{tpu_custom_call.1} parent=5 // pred_fallthru
        _
      %p165 = scmp.lt.s32.totalorder %s14, 4
      // Predicated region
      $region29: #{tpu_custom_call.1} parent=5 // pred_check
        %p166 = pneg %p165
      $region30: #{tpu_custom_call.1} parent=5 // pred_check_branch
        %168 = sbr.rel (%p166) target = $region32
      $region31: #{tpu_custom_call.1} parent=5 // pred_region
        _
      $region32: #{tpu_custom_call.1} parent=5 // pred_fallthru
        _
      %p169 = scmp.le.s32.totalorder 1, %s14
      %p170 = scmp.lt.s32.totalorder %s14, 5
      %p171 = pnand %p169, %p170
      %p172 = pneg %p171
      // Predicated region
      $region33: #{tpu_custom_call.1} parent=5 // pred_check
        _
      $region34: #{tpu_custom_call.1} parent=5 // pred_check_branch
        %174 = sbr.rel (%p171) target = $region36
      $region35: #{tpu_custom_call.1} parent=5 // pred_region
        %s175 = ssub.s32 %s14, 1
        %p176 = pneg %p47
        %p177 = pneg %p44
        %p178 = pneg %p68
        %p179 = pneg %p65
        %p180 = pneg %p89
        %p181 = pneg %p86
        %p182 = pneg %p110
        %p183 = pneg %p107
        %p184 = pneg %p138
        %p185 = pneg %p135
        %s186 = sand.u32 %s125, 1
        %s187 = scalar_lea.sflag [#allocation5], %s186
        %s188 = sand.u32 %s125, 1
        %s189 = smul.addr %s188, 128
        %s190 = scalar_lea.vmem [#allocation4], %s189
        %s191 = smul.u32 8, %s24
        %p193 = scmp.lt.s32.totalorder %s24, 0
        %s194 = ssub.s32 0, %s24
        %s195 = scalar_select %p193, %s194, %s24
        %s196 = sand.u32 %s195, 1
        %s197 = ssub.s32 0, %s196
        %s198 = scalar_select %p193, %s197, %s196
        %p199 = scmp.ne.s32.totalorder %s198, 0
        %p200 = scmp.lt.s32.totalorder %s198, 0
        %p201 = pnand %p200, %p199
        %p202 = pneg %p201
        %s203 = sadd.s32 %s198, 2
        %s204 = scalar_select %p202, %s203, %s198
        %p205 = scmp.eq.s32.totalorder %s24, 0
        // Predicated region
        $region37: #{tpu_custom_call.1} parent=35 // pred_check
          %p206 = pneg %p205
        $region38: #{tpu_custom_call.1} parent=35 // pred_check_branch
          %208 = sbr.rel (%p206) target = $region40
        $region39: #{tpu_custom_call.1} parent=35 // pred_region
          %s209 = smul.u32 0, 24
          %s210 = smul.u32 %s23, 432
          %s211 = sadd.s32 %s209, %s210
          %s212 = scalar_lea.vmem %s0, %s211
          %s213 = smul.u32 %s204, 240
          %s214 = scalar_lea.vmem [#allocation2], %s213
          %s215 = scalar_lea.sflag [#allocation3], %s204
          %p217 = scmp.lt.u32.totalorder 18, 8
          %p218 = pneg %p217
          // Predicated region
          $region41: #{tpu_custom_call.1} parent=39 // pred_check
            _
          $region42: #{tpu_custom_call.1} parent=39 // pred_check_branch
            %220 = sbr.rel (%p217) target = $region44
          $region43: #{tpu_custom_call.1} parent=39 // pred_region
            %s253 = sand.u32 18, 7
            %p254 = scmp.eq.s32.totalorder %s253, 0
            %p255 = pneg %p254
            // Predicated region
            $region56: #{tpu_custom_call.1} parent=43 // pred_check
              _
            $region57: #{tpu_custom_call.1} parent=43 // pred_check_branch
              %257 = sbr.rel (%p254) target = $region59
            $region58: #{tpu_custom_call.1} parent=43 // pred_region
              %s258 = sand.u32 18, 7
              %s259 = ssub.s32 18, %s258
              %s260 = scalar_lea.vmem %s212, %s259
              %s261 = ssub.s32 18, %s258
              %s262 = scalar_lea.vmem %s214, %s261 [#allocation2]
              loop: start=0, step=1, limit=1
              $region60: #{tpu_custom_call.1} parent=58 // loop_pre_header
                _
              $region61: #{tpu_custom_call.1} parent=58 // loop_header
                %s264 = sphi 0, %s268
                %p265 = scmp.ge.s32.totalorder %s264, 1
                %s269 = sphi %s212, %s212
                %s270 = sphi %s214, %s214
              $region62: #{tpu_custom_call.1} parent=58 // loop_header_branch
                %267 = sbr.rel (%p265) target = $region66
              $region63: #{tpu_custom_call.1} parent=58 // loop_body
                %v271 = vld [vmem:[%s269] sm:$0xff]
                %272 = vst [vmem:[%s270] sm:$0xff] %v271
                %v273 = vld [vmem:[%s269 + $0x8] sm:$0xff]
                %274 = vst [vmem:[%s270 + $0x8] sm:$0xff] %v273
                %v275 = vld [vmem:[%s269 + $0x18] sm:$0xff]
                %276 = vst [vmem:[%s270 + $0x18] sm:$0xff] %v275
                %v277 = vld [vmem:[%s269 + $0x20] sm:$0xff]
                %278 = vst [vmem:[%s270 + $0x20] sm:$0xff] %v277
                %v279 = vld [vmem:[%s269 + $0x30] sm:$0xff]
                %280 = vst [vmem:[%s270 + $0x30] sm:$0xff] %v279
                %v281 = vld [vmem:[%s269 + $0x38] sm:$0xff]
                %282 = vst [vmem:[%s270 + $0x38] sm:$0xff] %v281
                %v283 = vld [vmem:[%s269 + $0x48] sm:$0xff]
                %284 = vst [vmem:[%s270 + $0x48] sm:$0xff] %v283
                %v285 = vld [vmem:[%s269 + $0x50] sm:$0xff]
                %286 = vst [vmem:[%s270 + $0x50] sm:$0xff] %v285
                %v287 = vld [vmem:[%s269 + $0x60] sm:$0xff]
                %288 = vst [vmem:[%s270 + $0x60] sm:$0xff] %v287
                %v289 = vld [vmem:[%s269 + $0x68] sm:$0xff]
                %290 = vst [vmem:[%s270 + $0x68] sm:$0xff] %v289
                %v291 = vld [vmem:[%s269 + $0x78] sm:$0xff]
                %292 = vst [vmem:[%s270 + $0x78] sm:$0xff] %v291
                %v293 = vld [vmem:[%s269 + $0x80] sm:$0xff]
                %294 = vst [vmem:[%s270 + $0x80] sm:$0xff] %v293
                %v295 = vld [vmem:[%s269 + $0x90] sm:$0xff]
                %296 = vst [vmem:[%s270 + $0x90] sm:$0xff] %v295
                %v297 = vld [vmem:[%s269 + $0x98] sm:$0xff]
                %298 = vst [vmem:[%s270 + $0x98] sm:$0xff] %v297
                %v299 = vld [vmem:[%s269 + $0xa8] sm:$0xff]
                %300 = vst [vmem:[%s270 + $0xa8] sm:$0xff] %v299
                %v301 = vld [vmem:[%s269 + $0xb0] sm:$0xff]
                %302 = vst [vmem:[%s270 + $0xb0] sm:$0xff] %v301
                %v303 = vld [vmem:[%s269 + $0xc0] sm:$0xff]
                %304 = vst [vmem:[%s270 + $0xc0] sm:$0xff] %v303
                %v305 = vld [vmem:[%s269 + $0xc8] sm:$0xff]
                %306 = vst [vmem:[%s270 + $0xc8] sm:$0xff] %v305
                %v307 = vld [vmem:[%s269 + $0xd8] sm:$0xff]
                %308 = vst [vmem:[%s270 + $0xd8] sm:$0xff] %v307
                %v309 = vld [vmem:[%s269 + $0xe0] sm:$0xff]
                %310 = vst [vmem:[%s270 + $0xe0] sm:$0xff] %v309
              $region64: #{tpu_custom_call.1} parent=58 // loop_footer
                %s268 = sadd.s32 1, %s264
              $region65: #{tpu_custom_call.1} parent=58 // loop_footer_branch
                %263 = sbr.rel target = $region61
              $region66: #{tpu_custom_call.1} parent=58 // loop_exit
                _
              %s311 = sshllo.u32 0, %s258
              loop: start=0, step=1, limit=1
              $region67: #{tpu_custom_call.1} parent=58 // loop_pre_header
                _
              $region68: #{tpu_custom_call.1} parent=58 // loop_header
                %s313 = sphi 0, %s317
                %p314 = scmp.ge.s32.totalorder %s313, 1
                %s318 = sphi %s260, %s260
                %s319 = sphi %s262, %s262
              $region69: #{tpu_custom_call.1} parent=58 // loop_header_branch
                %316 = sbr.rel (%p314) target = $region73
              $region70: #{tpu_custom_call.1} parent=58 // loop_body
                %v320 = vld [vmem:[%s318] sm:%s311]
                %321 = vst [vmem:[%s319] sm:%s311] %v320
                %v322 = vld [vmem:[%s318 + $0x18] sm:%s311]
                %323 = vst [vmem:[%s319 + $0x18] sm:%s311] %v322
                %v324 = vld [vmem:[%s318 + $0x30] sm:%s311]
                %325 = vst [vmem:[%s319 + $0x30] sm:%s311] %v324
                %v326 = vld [vmem:[%s318 + $0x48] sm:%s311]
                %327 = vst [vmem:[%s319 + $0x48] sm:%s311] %v326
                %v328 = vld [vmem:[%s318 + $0x60] sm:%s311]
                %329 = vst [vmem:[%s319 + $0x60] sm:%s311] %v328
                %v330 = vld [vmem:[%s318 + $0x78] sm:%s311]
                %331 = vst [vmem:[%s319 + $0x78] sm:%s311] %v330
                %v332 = vld [vmem:[%s318 + $0x90] sm:%s311]
                %333 = vst [vmem:[%s319 + $0x90] sm:%s311] %v332
                %v334 = vld [vmem:[%s318 + $0xa8] sm:%s311]
                %335 = vst [vmem:[%s319 + $0xa8] sm:%s311] %v334
                %v336 = vld [vmem:[%s318 + $0xc0] sm:%s311]
                %337 = vst [vmem:[%s319 + $0xc0] sm:%s311] %v336
                %v338 = vld [vmem:[%s318 + $0xd8] sm:%s311]
                %339 = vst [vmem:[%s319 + $0xd8] sm:%s311] %v338
              $region71: #{tpu_custom_call.1} parent=58 // loop_footer
                %s317 = sadd.s32 1, %s313
              $region72: #{tpu_custom_call.1} parent=58 // loop_footer_branch
                %312 = sbr.rel target = $region68
              $region73: #{tpu_custom_call.1} parent=58 // loop_exit
                _
            $region59: #{tpu_custom_call.1} parent=43 // pred_fallthru
              _
          $region44: #{tpu_custom_call.1} parent=39 // pred_fallthru
            _
          // Predicated region
          $region45: #{tpu_custom_call.1} parent=39 // pred_check
            %p221 = pneg %p217
          $region46: #{tpu_custom_call.1} parent=39 // pred_check_branch
            %223 = sbr.rel (%p221) target = $region48
          $region47: #{tpu_custom_call.1} parent=39 // pred_region
            %s224 = sshllo.u32 0, 18
            loop: start=0, step=1, limit=1
            $region49: #{tpu_custom_call.1} parent=47 // loop_pre_header
              _
            $region50: #{tpu_custom_call.1} parent=47 // loop_header
              %s226 = sphi 0, %s230
              %p227 = scmp.ge.s32.totalorder %s226, 1
              %s231 = sphi %s212, %s212
              %s232 = sphi %s214, %s214
            $region51: #{tpu_custom_call.1} parent=47 // loop_header_branch
              %229 = sbr.rel (%p227) target = $region55
            $region52: #{tpu_custom_call.1} parent=47 // loop_body
              %v233 = vld [vmem:[%s231] sm:%s224]
              %234 = vst [vmem:[%s232] sm:%s224] %v233
              %v235 = vld [vmem:[%s231 + $0x18] sm:%s224]
              %236 = vst [vmem:[%s232 + $0x18] sm:%s224] %v235
              %v237 = vld [vmem:[%s231 + $0x30] sm:%s224]
              %238 = vst [vmem:[%s232 + $0x30] sm:%s224] %v237
              %v239 = vld [vmem:[%s231 + $0x48] sm:%s224]
              %240 = vst [vmem:[%s232 + $0x48] sm:%s224] %v239
              %v241 = vld [vmem:[%s231 + $0x60] sm:%s224]
              %242 = vst [vmem:[%s232 + $0x60] sm:%s224] %v241
              %v243 = vld [vmem:[%s231 + $0x78] sm:%s224]
              %244 = vst [vmem:[%s232 + $0x78] sm:%s224] %v243
              %v245 = vld [vmem:[%s231 + $0x90] sm:%s224]
              %246 = vst [vmem:[%s232 + $0x90] sm:%s224] %v245
              %v247 = vld [vmem:[%s231 + $0xa8] sm:%s224]
              %248 = vst [vmem:[%s232 + $0xa8] sm:%s224] %v247
              %v249 = vld [vmem:[%s231 + $0xc0] sm:%s224]
              %250 = vst [vmem:[%s232 + $0xc0] sm:%s224] %v249
              %v251 = vld [vmem:[%s231 + $0xd8] sm:%s224]
              %252 = vst [vmem:[%s232 + $0xd8] sm:%s224] %v251
            $region53: #{tpu_custom_call.1} parent=47 // loop_footer
              %s230 = sadd.s32 1, %s226
            $region54: #{tpu_custom_call.1} parent=47 // loop_footer_branch
              %225 = sbr.rel target = $region50
            $region55: #{tpu_custom_call.1} parent=47 // loop_exit
              _
          $region48: #{tpu_custom_call.1} parent=39 // pred_fallthru
            _
          // Predicated region
          $region74: #{tpu_custom_call.1} parent=39 // pred_check
            _
          $region75: #{tpu_custom_call.1} parent=39 // pred_check_branch
            %342 = sbr.rel (0) target = $region77
          $region76: #{tpu_custom_call.1} parent=39 // pred_region
            %343 = vsyncadd %s215, 2880
          $region77: #{tpu_custom_call.1} parent=39 // pred_fallthru
            _
        $region40: #{tpu_custom_call.1} parent=35 // pred_fallthru
          _
        %s344 = scalar_lea.sflag [#allocation3], %s204
        %s345 = smul.u32 10, 18
        %s346 = smul.u32 %s345, 1
        %s347 = sshll.u32 %s346, 4
        %348 = dma.done %s344, %s347
        %s349 = sadd.s32 %s24, 1
        %p350 = scmp.lt.s32.totalorder %s349, 2
        // Predicated region
        $region78: #{tpu_custom_call.1} parent=35 // pred_check
          %p351 = pneg %p350
        $region79: #{tpu_custom_call.1} parent=35 // pred_check_branch
          %353 = sbr.rel (%p351) target = $region81
        $region80: #{tpu_custom_call.1} parent=35 // pred_region
          %s354 = ssub.s32 1, %s204
          %s355 = smul.u32 %s349, 8
          %s356 = smul.u32 %s355, 24
          %s357 = smul.u32 %s23, 432
          %s358 = sadd.s32 %s356, %s357
          %s359 = scalar_lea.vmem %s0, %s358
          %s360 = smul.u32 %s354, 240
          %s361 = scalar_lea.vmem [#allocation2], %s360
          %s362 = scalar_lea.sflag [#allocation3], %s354
          %p364 = scmp.lt.u32.totalorder 18, 8
          %p365 = pneg %p364
          // Predicated region
          $region82: #{tpu_custom_call.1} parent=80 // pred_check
            _
          $region83: #{tpu_custom_call.1} parent=80 // pred_check_branch
            %367 = sbr.rel (%p364) target = $region85
          $region84: #{tpu_custom_call.1} parent=80 // pred_region
            %s400 = sand.u32 18, 7
            %p401 = scmp.eq.s32.totalorder %s400, 0
            %p402 = pneg %p401
            // Predicated region
            $region97: #{tpu_custom_call.1} parent=84 // pred_check
              _
            $region98: #{tpu_custom_call.1} parent=84 // pred_check_branch
              %404 = sbr.rel (%p401) target = $region100
            $region99: #{tpu_custom_call.1} parent=84 // pred_region
              %s405 = sand.u32 18, 7
              %s406 = ssub.s32 18, %s405
              %s407 = scalar_lea.vmem %s359, %s406
              %s408 = ssub.s32 18, %s405
              %s409 = scalar_lea.vmem %s361, %s408 [#allocation2]
              loop: start=0, step=1, limit=1
              $region101: #{tpu_custom_call.1} parent=99 // loop_pre_header
                _
              $region102: #{tpu_custom_call.1} parent=99 // loop_header
                %s411 = sphi 0, %s415
                %p412 = scmp.ge.s32.totalorder %s411, 1
                %s416 = sphi %s359, %s359
                %s417 = sphi %s361, %s361
              $region103: #{tpu_custom_call.1} parent=99 // loop_header_branch
                %414 = sbr.rel (%p412) target = $region107
              $region104: #{tpu_custom_call.1} parent=99 // loop_body
                %v418 = vld [vmem:[%s416] sm:$0xff]
                %419 = vst [vmem:[%s417] sm:$0xff] %v418
                %v420 = vld [vmem:[%s416 + $0x8] sm:$0xff]
                %421 = vst [vmem:[%s417 + $0x8] sm:$0xff] %v420
                %v422 = vld [vmem:[%s416 + $0x18] sm:$0xff]
                %423 = vst [vmem:[%s417 + $0x18] sm:$0xff] %v422
                %v424 = vld [vmem:[%s416 + $0x20] sm:$0xff]
                %425 = vst [vmem:[%s417 + $0x20] sm:$0xff] %v424
                %v426 = vld [vmem:[%s416 + $0x30] sm:$0xff]
                %427 = vst [vmem:[%s417 + $0x30] sm:$0xff] %v426
                %v428 = vld [vmem:[%s416 + $0x38] sm:$0xff]
                %429 = vst [vmem:[%s417 + $0x38] sm:$0xff] %v428
                %v430 = vld [vmem:[%s416 + $0x48] sm:$0xff]
                %431 = vst [vmem:[%s417 + $0x48] sm:$0xff] %v430
                %v432 = vld [vmem:[%s416 + $0x50] sm:$0xff]
                %433 = vst [vmem:[%s417 + $0x50] sm:$0xff] %v432
                %v434 = vld [vmem:[%s416 + $0x60] sm:$0xff]
                %435 = vst [vmem:[%s417 + $0x60] sm:$0xff] %v434
                %v436 = vld [vmem:[%s416 + $0x68] sm:$0xff]
                %437 = vst [vmem:[%s417 + $0x68] sm:$0xff] %v436
                %v438 = vld [vmem:[%s416 + $0x78] sm:$0xff]
                %439 = vst [vmem:[%s417 + $0x78] sm:$0xff] %v438
                %v440 = vld [vmem:[%s416 + $0x80] sm:$0xff]
                %441 = vst [vmem:[%s417 + $0x80] sm:$0xff] %v440
                %v442 = vld [vmem:[%s416 + $0x90] sm:$0xff]
                %443 = vst [vmem:[%s417 + $0x90] sm:$0xff] %v442
                %v444 = vld [vmem:[%s416 + $0x98] sm:$0xff]
                %445 = vst [vmem:[%s417 + $0x98] sm:$0xff] %v444
                %v446 = vld [vmem:[%s416 + $0xa8] sm:$0xff]
                %447 = vst [vmem:[%s417 + $0xa8] sm:$0xff] %v446
                %v448 = vld [vmem:[%s416 + $0xb0] sm:$0xff]
                %449 = vst [vmem:[%s417 + $0xb0] sm:$0xff] %v448
                %v450 = vld [vmem:[%s416 + $0xc0] sm:$0xff]
                %451 = vst [vmem:[%s417 + $0xc0] sm:$0xff] %v450
                %v452 = vld [vmem:[%s416 + $0xc8] sm:$0xff]
                %453 = vst [vmem:[%s417 + $0xc8] sm:$0xff] %v452
                %v454 = vld [vmem:[%s416 + $0xd8] sm:$0xff]
                %455 = vst [vmem:[%s417 + $0xd8] sm:$0xff] %v454
                %v456 = vld [vmem:[%s416 + $0xe0] sm:$0xff]
                %457 = vst [vmem:[%s417 + $0xe0] sm:$0xff] %v456
              $region105: #{tpu_custom_call.1} parent=99 // loop_footer
                %s415 = sadd.s32 1, %s411
              $region106: #{tpu_custom_call.1} parent=99 // loop_footer_branch
                %410 = sbr.rel target = $region102
              $region107: #{tpu_custom_call.1} parent=99 // loop_exit
                _
              %s458 = sshllo.u32 0, %s405
              loop: start=0, step=1, limit=1
              $region108: #{tpu_custom_call.1} parent=99 // loop_pre_header
                _
              $region109: #{tpu_custom_call.1} parent=99 // loop_header
                %s460 = sphi 0, %s464
                %p461 = scmp.ge.s32.totalorder %s460, 1
                %s465 = sphi %s407, %s407
                %s466 = sphi %s409, %s409
              $region110: #{tpu_custom_call.1} parent=99 // loop_header_branch
                %463 = sbr.rel (%p461) target = $region114
              $region111: #{tpu_custom_call.1} parent=99 // loop_body
                %v467 = vld [vmem:[%s465] sm:%s458]
                %468 = vst [vmem:[%s466] sm:%s458] %v467
                %v469 = vld [vmem:[%s465 + $0x18] sm:%s458]
                %470 = vst [vmem:[%s466 + $0x18] sm:%s458] %v469
                %v471 = vld [vmem:[%s465 + $0x30] sm:%s458]
                %472 = vst [vmem:[%s466 + $0x30] sm:%s458] %v471
                %v473 = vld [vmem:[%s465 + $0x48] sm:%s458]
                %474 = vst [vmem:[%s466 + $0x48] sm:%s458] %v473
                %v475 = vld [vmem:[%s465 + $0x60] sm:%s458]
                %476 = vst [vmem:[%s466 + $0x60] sm:%s458] %v475
                %v477 = vld [vmem:[%s465 + $0x78] sm:%s458]
                %478 = vst [vmem:[%s466 + $0x78] sm:%s458] %v477
                %v479 = vld [vmem:[%s465 + $0x90] sm:%s458]
                %480 = vst [vmem:[%s466 + $0x90] sm:%s458] %v479
                %v481 = vld [vmem:[%s465 + $0xa8] sm:%s458]
                %482 = vst [vmem:[%s466 + $0xa8] sm:%s458] %v481
                %v483 = vld [vmem:[%s465 + $0xc0] sm:%s458]
                %484 = vst [vmem:[%s466 + $0xc0] sm:%s458] %v483
                %v485 = vld [vmem:[%s465 + $0xd8] sm:%s458]
                %486 = vst [vmem:[%s466 + $0xd8] sm:%s458] %v485
              $region112: #{tpu_custom_call.1} parent=99 // loop_footer
                %s464 = sadd.s32 1, %s460
              $region113: #{tpu_custom_call.1} parent=99 // loop_footer_branch
                %459 = sbr.rel target = $region109
              $region114: #{tpu_custom_call.1} parent=99 // loop_exit
                _
            $region100: #{tpu_custom_call.1} parent=84 // pred_fallthru
              _
          $region85: #{tpu_custom_call.1} parent=80 // pred_fallthru
            _
          // Predicated region
          $region86: #{tpu_custom_call.1} parent=80 // pred_check
            %p368 = pneg %p364
          $region87: #{tpu_custom_call.1} parent=80 // pred_check_branch
            %370 = sbr.rel (%p368) target = $region89
          $region88: #{tpu_custom_call.1} parent=80 // pred_region
            %s371 = sshllo.u32 0, 18
            loop: start=0, step=1, limit=1
            $region90: #{tpu_custom_call.1} parent=88 // loop_pre_header
              _
            $region91: #{tpu_custom_call.1} parent=88 // loop_header
              %s373 = sphi 0, %s377
              %p374 = scmp.ge.s32.totalorder %s373, 1
              %s378 = sphi %s359, %s359
              %s379 = sphi %s361, %s361
            $region92: #{tpu_custom_call.1} parent=88 // loop_header_branch
              %376 = sbr.rel (%p374) target = $region96
            $region93: #{tpu_custom_call.1} parent=88 // loop_body
              %v380 = vld [vmem:[%s378] sm:%s371]
              %381 = vst [vmem:[%s379] sm:%s371] %v380
              %v382 = vld [vmem:[%s378 + $0x18] sm:%s371]
              %383 = vst [vmem:[%s379 + $0x18] sm:%s371] %v382
              %v384 = vld [vmem:[%s378 + $0x30] sm:%s371]
              %385 = vst [vmem:[%s379 + $0x30] sm:%s371] %v384
              %v386 = vld [vmem:[%s378 + $0x48] sm:%s371]
              %387 = vst [vmem:[%s379 + $0x48] sm:%s371] %v386
              %v388 = vld [vmem:[%s378 + $0x60] sm:%s371]
              %389 = vst [vmem:[%s379 + $0x60] sm:%s371] %v388
              %v390 = vld [vmem:[%s378 + $0x78] sm:%s371]
              %391 = vst [vmem:[%s379 + $0x78] sm:%s371] %v390
              %v392 = vld [vmem:[%s378 + $0x90] sm:%s371]
              %393 = vst [vmem:[%s379 + $0x90] sm:%s371] %v392
              %v394 = vld [vmem:[%s378 + $0xa8] sm:%s371]
              %395 = vst [vmem:[%s379 + $0xa8] sm:%s371] %v394
              %v396 = vld [vmem:[%s378 + $0xc0] sm:%s371]
              %397 = vst [vmem:[%s379 + $0xc0] sm:%s371] %v396
              %v398 = vld [vmem:[%s378 + $0xd8] sm:%s371]
              %399 = vst [vmem:[%s379 + $0xd8] sm:%s371] %v398
            $region94: #{tpu_custom_call.1} parent=88 // loop_footer
              %s377 = sadd.s32 1, %s373
            $region95: #{tpu_custom_call.1} parent=88 // loop_footer_branch
              %372 = sbr.rel target = $region91
            $region96: #{tpu_custom_call.1} parent=88 // loop_exit
              _
          $region89: #{tpu_custom_call.1} parent=80 // pred_fallthru
            _
          // Predicated region
          $region115: #{tpu_custom_call.1} parent=80 // pred_check
            _
          $region116: #{tpu_custom_call.1} parent=80 // pred_check_branch
            %489 = sbr.rel (0) target = $region118
          $region117: #{tpu_custom_call.1} parent=80 // pred_region
            %490 = vsyncadd %s362, 2880
          $region118: #{tpu_custom_call.1} parent=80 // pred_fallthru
            _
        $region81: #{tpu_custom_call.1} parent=35 // pred_fallthru
          _
        %v491 = vld [vmem:[%s2] sm:$0x1]
        %v492 = vld [vmem:[%s4] sm:$0x1]
        %v493 = vld [vmem:[%s3] sm:$0xf]
        %v494 = vld [vmem:[%s3 + $0x4] sm:$0xf]
        %v495 = vld [vmem:[%s3 + $0x8] sm:$0xf]
        %v496 = vld [vmem:[%s3 + $0xc] sm:$0xf]
        %v497 = vld [vmem:[%s3 + $0x10] sm:$0xf]
        %v498 = vld [vmem:[%s3 + $0x14] sm:$0xf]
        %v499 = vld [vmem:[%s3 + $0x18] sm:$0xf]
        %v500 = vld [vmem:[%s3 + $0x1c] sm:$0xf]
        %v501 = vld [vmem:[%s3 + $0x20] sm:$0xf]
        %v502 = vld [vmem:[%s3 + $0x24] sm:$0xf]
        %v503 = vld [vmem:[%s3 + $0x28] sm:$0xf]
        %v504 = vld [vmem:[%s3 + $0x2c] sm:$0xf]
        %v505 = vld [vmem:[%s3 + $0x30] sm:$0xf]
        %v506 = vld [vmem:[%s3 + $0x34] sm:$0xf]
        %v507 = vld [vmem:[%s3 + $0x38] sm:$0xf]
        %v508 = vld [vmem:[%s3 + $0x3c] sm:$0xf]
        %s509 = smul.u32 %s204, 240
        %s510 = scalar_lea.vmem [#allocation2], %s509
        %v511 = vld [vmem:[%s510] sm:$0xff]
        %v512 = vld [vmem:[%s510 + $0x8] sm:$0xff]
        %v513 = vld [vmem:[%s510 + $0x18] sm:$0xff]
        %v514 = vld [vmem:[%s510 + $0x20] sm:$0xff]
        %v515 = vld [vmem:[%s510 + $0x30] sm:$0xff]
        %v516 = vld [vmem:[%s510 + $0x38] sm:$0xff]
        %v517 = vld [vmem:[%s510 + $0x48] sm:$0xff]
        %v518 = vld [vmem:[%s510 + $0x50] sm:$0xff]
        %v519 = vld [vmem:[%s510 + $0x60] sm:$0xff]
        %v520 = vld [vmem:[%s510 + $0x68] sm:$0xff]
        %v521 = vld [vmem:[%s510 + $0x78] sm:$0xff]
        %v522 = vld [vmem:[%s510 + $0x80] sm:$0xff]
        %v523 = vld [vmem:[%s510 + $0x90] sm:$0xff]
        %v524 = vld [vmem:[%s510 + $0x98] sm:$0xff]
        %v525 = vld [vmem:[%s510 + $0xa8] sm:$0xff]
        %v526 = vld [vmem:[%s510 + $0xb0] sm:$0xff]
        %v527 = vld [vmem:[%s1] sm:$0x1]
        %v528 = vlaneseq
        %v529 = vshrl.u32 %v528, 7
        %v530 = vsub.s32 0, %v529
        %v531 = vrot.slane %v527, %v530
        %v532 = vmul.f32 %v511, %v531
        %v533 = vmul.f32 %v512, %v531
        %v534 = vmul.f32 %v513, %v531
        %v535 = vmul.f32 %v514, %v531
        %v536 = vmul.f32 %v515, %v531
        %v537 = vmul.f32 %v516, %v531
        %v538 = vmul.f32 %v517, %v531
        %v539 = vmul.f32 %v518, %v531
        %v540 = vmul.f32 %v519, %v531
        %v541 = vmul.f32 %v520, %v531
        %v542 = vmul.f32 %v521, %v531
        %v543 = vmul.f32 %v522, %v531
        %v544 = vmul.f32 %v523, %v531
        %v545 = vmul.f32 %v524, %v531
        %v546 = vmul.f32 %v525, %v531
        %v547 = vmul.f32 %v526, %v531
        %v548 = vadd.f32 %v532, 0.0
        %v549 = vadd.f32 %v533, 0.0
        %v550 = vadd.f32 %v534, 0.0
        %v551 = vadd.f32 %v535, 0.0
        %v552 = vadd.f32 %v536, 0.0
        %v553 = vadd.f32 %v537, 0.0
        %v554 = vadd.f32 %v538, 0.0
        %v555 = vadd.f32 %v539, 0.0
        %v556 = vadd.f32 %v540, 0.0
        %v557 = vadd.f32 %v541, 0.0
        %v558 = vadd.f32 %v542, 0.0
        %v559 = vadd.f32 %v543, 0.0
        %v560 = vadd.f32 %v544, 0.0
        %v561 = vadd.f32 %v545, 0.0
        %v562 = vadd.f32 %v546, 0.0
        %v563 = vadd.f32 %v547, 0.0
        %v564 = vld [vmem:[%s510 + $0x1] sm:$0xff]
        %v565 = vld [vmem:[%s510 + $0x9] sm:$0xff]
        %v566 = vld [vmem:[%s510 + $0x19] sm:$0xff]
        %v567 = vld [vmem:[%s510 + $0x21] sm:$0xff]
        %v568 = vld [vmem:[%s510 + $0x31] sm:$0xff]
        %v569 = vld [vmem:[%s510 + $0x39] sm:$0xff]
        %v570 = vld [vmem:[%s510 + $0x49] sm:$0xff]
        %v571 = vld [vmem:[%s510 + $0x51] sm:$0xff]
        %v572 = vld [vmem:[%s510 + $0x61] sm:$0xff]
        %v573 = vld [vmem:[%s510 + $0x69] sm:$0xff]
        %v574 = vld [vmem:[%s510 + $0x79] sm:$0xff]
        %v575 = vld [vmem:[%s510 + $0x81] sm:$0xff]
        %v576 = vld [vmem:[%s510 + $0x91] sm:$0xff]
        %v577 = vld [vmem:[%s510 + $0x99] sm:$0xff]
        %v578 = vld [vmem:[%s510 + $0xa9] sm:$0xff]
        %v579 = vld [vmem:[%s510 + $0xb1] sm:$0xff]
        %v580 = vld [vmem:[%s1 + $0x1] sm:$0x1]
        %v581 = vlaneseq
        %v582 = vshrl.u32 %v581, 7
        %v583 = vsub.s32 0, %v582
        %v584 = vrot.slane %v580, %v583
        %v585 = vmul.f32 %v564, %v584
        %v586 = vmul.f32 %v565, %v584
        %v587 = vmul.f32 %v566, %v584
        %v588 = vmul.f32 %v567, %v584
        %v589 = vmul.f32 %v568, %v584
        %v590 = vmul.f32 %v569, %v584
        %v591 = vmul.f32 %v570, %v584
        %v592 = vmul.f32 %v571, %v584
        %v593 = vmul.f32 %v572, %v584
        %v594 = vmul.f32 %v573, %v584
        %v595 = vmul.f32 %v574, %v584
        %v596 = vmul.f32 %v575, %v584
        %v597 = vmul.f32 %v576, %v584
        %v598 = vmul.f32 %v577, %v584
        %v599 = vmul.f32 %v578, %v584
        %v600 = vmul.f32 %v579, %v584
        %v601 = vadd.f32 %v548, %v585
        %v602 = vadd.f32 %v549, %v586
        %v603 = vadd.f32 %v550, %v587
        %v604 = vadd.f32 %v551, %v588
        %v605 = vadd.f32 %v552, %v589
        %v606 = vadd.f32 %v553, %v590
        %v607 = vadd.f32 %v554, %v591
        %v608 = vadd.f32 %v555, %v592
        %v609 = vadd.f32 %v556, %v593
        %v610 = vadd.f32 %v557, %v594
        %v611 = vadd.f32 %v558, %v595
        %v612 = vadd.f32 %v559, %v596
        %v613 = vadd.f32 %v560, %v597
        %v614 = vadd.f32 %v561, %v598
        %v615 = vadd.f32 %v562, %v599
        %v616 = vadd.f32 %v563, %v600
        %v617 = vld [vmem:[%s510 + $0x2] sm:$0xff]
        %v618 = vld [vmem:[%s510 + $0xa] sm:$0xff]
        %v619 = vld [vmem:[%s510 + $0x1a] sm:$0xff]
        %v620 = vld [vmem:[%s510 + $0x22] sm:$0xff]
        %v621 = vld [vmem:[%s510 + $0x32] sm:$0xff]
        %v622 = vld [vmem:[%s510 + $0x3a] sm:$0xff]
        %v623 = vld [vmem:[%s510 + $0x4a] sm:$0xff]
        %v624 = vld [vmem:[%s510 + $0x52] sm:$0xff]
        %v625 = vld [vmem:[%s510 + $0x62] sm:$0xff]
        %v626 = vld [vmem:[%s510 + $0x6a] sm:$0xff]
        %v627 = vld [vmem:[%s510 + $0x7a] sm:$0xff]
        %v628 = vld [vmem:[%s510 + $0x82] sm:$0xff]
        %v629 = vld [vmem:[%s510 + $0x92] sm:$0xff]
        %v630 = vld [vmem:[%s510 + $0x9a] sm:$0xff]
        %v631 = vld [vmem:[%s510 + $0xaa] sm:$0xff]
        %v632 = vld [vmem:[%s510 + $0xb2] sm:$0xff]
        %v633 = vld [vmem:[%s1 + $0x2] sm:$0x1]
        %v634 = vlaneseq
        %v635 = vshrl.u32 %v634, 7
        %v636 = vsub.s32 0, %v635
        %v637 = vrot.slane %v633, %v636
        %v638 = vmul.f32 %v617, %v637
        %v639 = vmul.f32 %v618, %v637
        %v640 = vmul.f32 %v619, %v637
        %v641 = vmul.f32 %v620, %v637
        %v642 = vmul.f32 %v621, %v637
        %v643 = vmul.f32 %v622, %v637
        %v644 = vmul.f32 %v623, %v637
        %v645 = vmul.f32 %v624, %v637
        %v646 = vmul.f32 %v625, %v637
        %v647 = vmul.f32 %v626, %v637
        %v648 = vmul.f32 %v627, %v637
        %v649 = vmul.f32 %v628, %v637
        %v650 = vmul.f32 %v629, %v637
        %v651 = vmul.f32 %v630, %v637
        %v652 = vmul.f32 %v631, %v637
        %v653 = vmul.f32 %v632, %v637
        %v654 = vadd.f32 %v601, %v638
        %v655 = vadd.f32 %v602, %v639
        %v656 = vadd.f32 %v603, %v640
        %v657 = vadd.f32 %v604, %v641
        %v658 = vadd.f32 %v605, %v642
        %v659 = vadd.f32 %v606, %v643
        %v660 = vadd.f32 %v607, %v644
        %v661 = vadd.f32 %v608, %v645
        %v662 = vadd.f32 %v609, %v646
        %v663 = vadd.f32 %v610, %v647
        %v664 = vadd.f32 %v611, %v648
        %v665 = vadd.f32 %v612, %v649
        %v666 = vadd.f32 %v613, %v650
        %v667 = vadd.f32 %v614, %v651
        %v668 = vadd.f32 %v615, %v652
        %v669 = vadd.f32 %v616, %v653
        %s670 = sadd.s32 24, %s509
        %s671 = scalar_lea.vmem [#allocation2], %s670
        %v672 = vld [vmem:[%s671] sm:$0xff]
        %v673 = vld [vmem:[%s671 + $0x8] sm:$0xff]
        %v674 = vld [vmem:[%s671 + $0x18] sm:$0xff]
        %v675 = vld [vmem:[%s671 + $0x20] sm:$0xff]
        %v676 = vld [vmem:[%s671 + $0x30] sm:$0xff]
        %v677 = vld [vmem:[%s671 + $0x38] sm:$0xff]
        %v678 = vld [vmem:[%s671 + $0x48] sm:$0xff]
        %v679 = vld [vmem:[%s671 + $0x50] sm:$0xff]
        %v680 = vld [vmem:[%s671 + $0x60] sm:$0xff]
        %v681 = vld [vmem:[%s671 + $0x68] sm:$0xff]
        %v682 = vld [vmem:[%s671 + $0x78] sm:$0xff]
        %v683 = vld [vmem:[%s671 + $0x80] sm:$0xff]
        %v684 = vld [vmem:[%s671 + $0x90] sm:$0xff]
        %v685 = vld [vmem:[%s671 + $0x98] sm:$0xff]
        %v686 = vld [vmem:[%s671 + $0xa8] sm:$0xff]
        %v687 = vld [vmem:[%s671 + $0xb0] sm:$0xff]
        %v688 = vld [vmem:[%s1 + $0x3] sm:$0x1]
        %v689 = vlaneseq
        %v690 = vshrl.u32 %v689, 7
        %v691 = vsub.s32 0, %v690
        %v692 = vrot.slane %v688, %v691
        %v693 = vmul.f32 %v672, %v692
        %v694 = vmul.f32 %v673, %v692
        %v695 = vmul.f32 %v674, %v692
        %v696 = vmul.f32 %v675, %v692
        %v697 = vmul.f32 %v676, %v692
        %v698 = vmul.f32 %v677, %v692
        %v699 = vmul.f32 %v678, %v692
        %v700 = vmul.f32 %v679, %v692
        %v701 = vmul.f32 %v680, %v692
        %v702 = vmul.f32 %v681, %v692
        %v703 = vmul.f32 %v682, %v692
        %v704 = vmul.f32 %v683, %v692
        %v705 = vmul.f32 %v684, %v692
        %v706 = vmul.f32 %v685, %v692
        %v707 = vmul.f32 %v686, %v692
        %v708 = vmul.f32 %v687, %v692
        %v709 = vadd.f32 %v654, %v693
        %v710 = vadd.f32 %v655, %v694
        %v711 = vadd.f32 %v656, %v695
        %v712 = vadd.f32 %v657, %v696
        %v713 = vadd.f32 %v658, %v697
        %v714 = vadd.f32 %v659, %v698
        %v715 = vadd.f32 %v660, %v699
        %v716 = vadd.f32 %v661, %v700
        %v717 = vadd.f32 %v662, %v701
        %v718 = vadd.f32 %v663, %v702
        %v719 = vadd.f32 %v664, %v703
        %v720 = vadd.f32 %v665, %v704
        %v721 = vadd.f32 %v666, %v705
        %v722 = vadd.f32 %v667, %v706
        %v723 = vadd.f32 %v668, %v707
        %v724 = vadd.f32 %v669, %v708
        %v725 = vld [vmem:[%s671 + $0x1] sm:$0xff]
        %v726 = vld [vmem:[%s671 + $0x9] sm:$0xff]
        %v727 = vld [vmem:[%s671 + $0x19] sm:$0xff]
        %v728 = vld [vmem:[%s671 + $0x21] sm:$0xff]
        %v729 = vld [vmem:[%s671 + $0x31] sm:$0xff]
        %v730 = vld [vmem:[%s671 + $0x39] sm:$0xff]
        %v731 = vld [vmem:[%s671 + $0x49] sm:$0xff]
        %v732 = vld [vmem:[%s671 + $0x51] sm:$0xff]
        %v733 = vld [vmem:[%s671 + $0x61] sm:$0xff]
        %v734 = vld [vmem:[%s671 + $0x69] sm:$0xff]
        %v735 = vld [vmem:[%s671 + $0x79] sm:$0xff]
        %v736 = vld [vmem:[%s671 + $0x81] sm:$0xff]
        %v737 = vld [vmem:[%s671 + $0x91] sm:$0xff]
        %v738 = vld [vmem:[%s671 + $0x99] sm:$0xff]
        %v739 = vld [vmem:[%s671 + $0xa9] sm:$0xff]
        %v740 = vld [vmem:[%s671 + $0xb1] sm:$0xff]
        %v741 = vld [vmem:[%s1 + $0x4] sm:$0x1]
        %v742 = vlaneseq
        %v743 = vshrl.u32 %v742, 7
        %v744 = vsub.s32 0, %v743
        %v745 = vrot.slane %v741, %v744
        %v746 = vmul.f32 %v725, %v745
        %v747 = vmul.f32 %v726, %v745
        %v748 = vmul.f32 %v727, %v745
        %v749 = vmul.f32 %v728, %v745
        %v750 = vmul.f32 %v729, %v745
        %v751 = vmul.f32 %v730, %v745
        %v752 = vmul.f32 %v731, %v745
        %v753 = vmul.f32 %v732, %v745
        %v754 = vmul.f32 %v733, %v745
        %v755 = vmul.f32 %v734, %v745
        %v756 = vmul.f32 %v735, %v745
        %v757 = vmul.f32 %v736, %v745
        %v758 = vmul.f32 %v737, %v745
        %v759 = vmul.f32 %v738, %v745
        %v760 = vmul.f32 %v739, %v745
        %v761 = vmul.f32 %v740, %v745
        %v762 = vadd.f32 %v709, %v746
        %v763 = vadd.f32 %v710, %v747
        %v764 = vadd.f32 %v711, %v748
        %v765 = vadd.f32 %v712, %v749
        %v766 = vadd.f32 %v713, %v750
        %v767 = vadd.f32 %v714, %v751
        %v768 = vadd.f32 %v715, %v752
        %v769 = vadd.f32 %v716, %v753
        %v770 = vadd.f32 %v717, %v754
        %v771 = vadd.f32 %v718, %v755
        %v772 = vadd.f32 %v719, %v756
        %v773 = vadd.f32 %v720, %v757
        %v774 = vadd.f32 %v721, %v758
        %v775 = vadd.f32 %v722, %v759
        %v776 = vadd.f32 %v723, %v760
        %v777 = vadd.f32 %v724, %v761
        %v778 = vld [vmem:[%s671 + $0x2] sm:$0xff]
        %v779 = vld [vmem:[%s671 + $0xa] sm:$0xff]
        %v780 = vld [vmem:[%s671 + $0x1a] sm:$0xff]
        %v781 = vld [vmem:[%s671 + $0x22] sm:$0xff]
        %v782 = vld [vmem:[%s671 + $0x32] sm:$0xff]
        %v783 = vld [vmem:[%s671 + $0x3a] sm:$0xff]
        %v784 = vld [vmem:[%s671 + $0x4a] sm:$0xff]
        %v785 = vld [vmem:[%s671 + $0x52] sm:$0xff]
        %v786 = vld [vmem:[%s671 + $0x62] sm:$0xff]
        %v787 = vld [vmem:[%s671 + $0x6a] sm:$0xff]
        %v788 = vld [vmem:[%s671 + $0x7a] sm:$0xff]
        %v789 = vld [vmem:[%s671 + $0x82] sm:$0xff]
        %v790 = vld [vmem:[%s671 + $0x92] sm:$0xff]
        %v791 = vld [vmem:[%s671 + $0x9a] sm:$0xff]
        %v792 = vld [vmem:[%s671 + $0xaa] sm:$0xff]
        %v793 = vld [vmem:[%s671 + $0xb2] sm:$0xff]
        %v794 = vld [vmem:[%s1 + $0x5] sm:$0x1]
        %v795 = vlaneseq
        %v796 = vshrl.u32 %v795, 7
        %v797 = vsub.s32 0, %v796
        %v798 = vrot.slane %v794, %v797
        %v799 = vmul.f32 %v778, %v798
        %v800 = vmul.f32 %v779, %v798
        %v801 = vmul.f32 %v780, %v798
        %v802 = vmul.f32 %v781, %v798
        %v803 = vmul.f32 %v782, %v798
        %v804 = vmul.f32 %v783, %v798
        %v805 = vmul.f32 %v784, %v798
        %v806 = vmul.f32 %v785, %v798
        %v807 = vmul.f32 %v786, %v798
        %v808 = vmul.f32 %v787, %v798
        %v809 = vmul.f32 %v788, %v798
        %v810 = vmul.f32 %v789, %v798
        %v811 = vmul.f32 %v790, %v798
        %v812 = vmul.f32 %v791, %v798
        %v813 = vmul.f32 %v792, %v798
        %v814 = vmul.f32 %v793, %v798
        %v815 = vadd.f32 %v762, %v799
        %v816 = vadd.f32 %v763, %v800
        %v817 = vadd.f32 %v764, %v801
        %v818 = vadd.f32 %v765, %v802
        %v819 = vadd.f32 %v766, %v803
        %v820 = vadd.f32 %v767, %v804
        %v821 = vadd.f32 %v768, %v805
        %v822 = vadd.f32 %v769, %v806
        %v823 = vadd.f32 %v770, %v807
        %v824 = vadd.f32 %v771, %v808
        %v825 = vadd.f32 %v772, %v809
        %v826 = vadd.f32 %v773, %v810
        %v827 = vadd.f32 %v774, %v811
        %v828 = vadd.f32 %v775, %v812
        %v829 = vadd.f32 %v776, %v813
        %v830 = vadd.f32 %v777, %v814
        %s831 = sadd.s32 48, %s509
        %s832 = scalar_lea.vmem [#allocation2], %s831
        %v833 = vld [vmem:[%s832] sm:$0xff]
        %v834 = vld [vmem:[%s832 + $0x8] sm:$0xff]
        %v835 = vld [vmem:[%s832 + $0x18] sm:$0xff]
        %v836 = vld [vmem:[%s832 + $0x20] sm:$0xff]
        %v837 = vld [vmem:[%s832 + $0x30] sm:$0xff]
        %v838 = vld [vmem:[%s832 + $0x38] sm:$0xff]
        %v839 = vld [vmem:[%s832 + $0x48] sm:$0xff]
        %v840 = vld [vmem:[%s832 + $0x50] sm:$0xff]
        %v841 = vld [vmem:[%s832 + $0x60] sm:$0xff]
        %v842 = vld [vmem:[%s832 + $0x68] sm:$0xff]
        %v843 = vld [vmem:[%s832 + $0x78] sm:$0xff]
        %v844 = vld [vmem:[%s832 + $0x80] sm:$0xff]
        %v845 = vld [vmem:[%s832 + $0x90] sm:$0xff]
        %v846 = vld [vmem:[%s832 + $0x98] sm:$0xff]
        %v847 = vld [vmem:[%s832 + $0xa8] sm:$0xff]
        %v848 = vld [vmem:[%s832 + $0xb0] sm:$0xff]
        %v849 = vld [vmem:[%s1 + $0x6] sm:$0x1]
        %v850 = vlaneseq
        %v851 = vshrl.u32 %v850, 7
        %v852 = vsub.s32 0, %v851
        %v853 = vrot.slane %v849, %v852
        %v854 = vmul.f32 %v833, %v853
        %v855 = vmul.f32 %v834, %v853
        %v856 = vmul.f32 %v835, %v853
        %v857 = vmul.f32 %v836, %v853
        %v858 = vmul.f32 %v837, %v853
        %v859 = vmul.f32 %v838, %v853
        %v860 = vmul.f32 %v839, %v853
        %v861 = vmul.f32 %v840, %v853
        %v862 = vmul.f32 %v841, %v853
        %v863 = vmul.f32 %v842, %v853
        %v864 = vmul.f32 %v843, %v853
        %v865 = vmul.f32 %v844, %v853
        %v866 = vmul.f32 %v845, %v853
        %v867 = vmul.f32 %v846, %v853
        %v868 = vmul.f32 %v847, %v853
        %v869 = vmul.f32 %v848, %v853
        %v870 = vadd.f32 %v815, %v854
        %v871 = vadd.f32 %v816, %v855
        %v872 = vadd.f32 %v817, %v856
        %v873 = vadd.f32 %v818, %v857
        %v874 = vadd.f32 %v819, %v858
        %v875 = vadd.f32 %v820, %v859
        %v876 = vadd.f32 %v821, %v860
        %v877 = vadd.f32 %v822, %v861
        %v878 = vadd.f32 %v823, %v862
        %v879 = vadd.f32 %v824, %v863
        %v880 = vadd.f32 %v825, %v864
        %v881 = vadd.f32 %v826, %v865
        %v882 = vadd.f32 %v827, %v866
        %v883 = vadd.f32 %v828, %v867
        %v884 = vadd.f32 %v829, %v868
        %v885 = vadd.f32 %v830, %v869
        %v886 = vld [vmem:[%s832 + $0x1] sm:$0xff]
        %v887 = vld [vmem:[%s832 + $0x9] sm:$0xff]
        %v888 = vld [vmem:[%s832 + $0x19] sm:$0xff]
        %v889 = vld [vmem:[%s832 + $0x21] sm:$0xff]
        %v890 = vld [vmem:[%s832 + $0x31] sm:$0xff]
        %v891 = vld [vmem:[%s832 + $0x39] sm:$0xff]
        %v892 = vld [vmem:[%s832 + $0x49] sm:$0xff]
        %v893 = vld [vmem:[%s832 + $0x51] sm:$0xff]
        %v894 = vld [vmem:[%s832 + $0x61] sm:$0xff]
        %v895 = vld [vmem:[%s832 + $0x69] sm:$0xff]
        %v896 = vld [vmem:[%s832 + $0x79] sm:$0xff]
        %v897 = vld [vmem:[%s832 + $0x81] sm:$0xff]
        %v898 = vld [vmem:[%s832 + $0x91] sm:$0xff]
        %v899 = vld [vmem:[%s832 + $0x99] sm:$0xff]
        %v900 = vld [vmem:[%s832 + $0xa9] sm:$0xff]
        %v901 = vld [vmem:[%s832 + $0xb1] sm:$0xff]
        %v902 = vld [vmem:[%s1 + $0x7] sm:$0x1]
        %v903 = vlaneseq
        %v904 = vshrl.u32 %v903, 7
        %v905 = vsub.s32 0, %v904
        %v906 = vrot.slane %v902, %v905
        %v907 = vmul.f32 %v886, %v906
        %v908 = vmul.f32 %v887, %v906
        %v909 = vmul.f32 %v888, %v906
        %v910 = vmul.f32 %v889, %v906
        %v911 = vmul.f32 %v890, %v906
        %v912 = vmul.f32 %v891, %v906
        %v913 = vmul.f32 %v892, %v906
        %v914 = vmul.f32 %v893, %v906
        %v915 = vmul.f32 %v894, %v906
        %v916 = vmul.f32 %v895, %v906
        %v917 = vmul.f32 %v896, %v906
        %v918 = vmul.f32 %v897, %v906
        %v919 = vmul.f32 %v898, %v906
        %v920 = vmul.f32 %v899, %v906
        %v921 = vmul.f32 %v900, %v906
        %v922 = vmul.f32 %v901, %v906
        %v923 = vadd.f32 %v870, %v907
        %v924 = vadd.f32 %v871, %v908
        %v925 = vadd.f32 %v872, %v909
        %v926 = vadd.f32 %v873, %v910
        %v927 = vadd.f32 %v874, %v911
        %v928 = vadd.f32 %v875, %v912
        %v929 = vadd.f32 %v876, %v913
        %v930 = vadd.f32 %v877, %v914
        %v931 = vadd.f32 %v878, %v915
        %v932 = vadd.f32 %v879, %v916
        %v933 = vadd.f32 %v880, %v917
        %v934 = vadd.f32 %v881, %v918
        %v935 = vadd.f32 %v882, %v919
        %v936 = vadd.f32 %v883, %v920
        %v937 = vadd.f32 %v884, %v921
        %v938 = vadd.f32 %v885, %v922
        %v939 = vld [vmem:[%s832 + $0x2] sm:$0xff]
        %v940 = vld [vmem:[%s832 + $0xa] sm:$0xff]
        %v941 = vld [vmem:[%s832 + $0x1a] sm:$0xff]
        %v942 = vld [vmem:[%s832 + $0x22] sm:$0xff]
        %v943 = vld [vmem:[%s832 + $0x32] sm:$0xff]
        %v944 = vld [vmem:[%s832 + $0x3a] sm:$0xff]
        %v945 = vld [vmem:[%s832 + $0x4a] sm:$0xff]
        %v946 = vld [vmem:[%s832 + $0x52] sm:$0xff]
        %v947 = vld [vmem:[%s832 + $0x62] sm:$0xff]
        %v948 = vld [vmem:[%s832 + $0x6a] sm:$0xff]
        %v949 = vld [vmem:[%s832 + $0x7a] sm:$0xff]
        %v950 = vld [vmem:[%s832 + $0x82] sm:$0xff]
        %v951 = vld [vmem:[%s832 + $0x92] sm:$0xff]
        %v952 = vld [vmem:[%s832 + $0x9a] sm:$0xff]
        %v953 = vld [vmem:[%s832 + $0xaa] sm:$0xff]
        %v954 = vld [vmem:[%s832 + $0xb2] sm:$0xff]
        %v955 = vld [vmem:[%s1 + $0x8] sm:$0x1]
        %v956 = vlaneseq
        %v957 = vshrl.u32 %v956, 7
        %v958 = vsub.s32 0, %v957
        %v959 = vrot.slane %v955, %v958
        %v960 = vmul.f32 %v939, %v959
        %v961 = vmul.f32 %v940, %v959
        %v962 = vmul.f32 %v941, %v959
        %v963 = vmul.f32 %v942, %v959
        %v964 = vmul.f32 %v943, %v959
        %v965 = vmul.f32 %v944, %v959
        %v966 = vmul.f32 %v945, %v959
        %v967 = vmul.f32 %v946, %v959
        %v968 = vmul.f32 %v947, %v959
        %v969 = vmul.f32 %v948, %v959
        %v970 = vmul.f32 %v949, %v959
        %v971 = vmul.f32 %v950, %v959
        %v972 = vmul.f32 %v951, %v959
        %v973 = vmul.f32 %v952, %v959
        %v974 = vmul.f32 %v953, %v959
        %v975 = vmul.f32 %v954, %v959
        %v976 = vadd.f32 %v923, %v960
        %v977 = vadd.f32 %v924, %v961
        %v978 = vadd.f32 %v925, %v962
        %v979 = vadd.f32 %v926, %v963
        %v980 = vadd.f32 %v927, %v964
        %v981 = vadd.f32 %v928, %v965
        %v982 = vadd.f32 %v929, %v966
        %v983 = vadd.f32 %v930, %v967
        %v984 = vadd.f32 %v931, %v968
        %v985 = vadd.f32 %v932, %v969
        %v986 = vadd.f32 %v933, %v970
        %v987 = vadd.f32 %v934, %v971
        %v988 = vadd.f32 %v935, %v972
        %v989 = vadd.f32 %v936, %v973
        %v990 = vadd.f32 %v937, %v974
        %v991 = vadd.f32 %v938, %v975
        %v993 = vlaneseq
        %v994 = vshrl.u32 %v993, 7
        %v995 = vsub.s32 0, %v994
        %v996 = vrot.slane %v491, %v995
        %v998 = vadd.f32 %v976, %v996
        %v999 = vadd.f32 %v977, %v996
        %v1000 = vadd.f32 %v978, %v996
        %v1001 = vadd.f32 %v979, %v996
        %v1002 = vadd.f32 %v980, %v996
        %v1003 = vadd.f32 %v981, %v996
        %v1004 = vadd.f32 %v982, %v996
        %v1005 = vadd.f32 %v983, %v996
        %v1006 = vadd.f32 %v984, %v996
        %v1007 = vadd.f32 %v985, %v996
        %v1008 = vadd.f32 %v986, %v996
        %v1009 = vadd.f32 %v987, %v996
        %v1010 = vadd.f32 %v988, %v996
        %v1011 = vadd.f32 %v989, %v996
        %v1012 = vadd.f32 %v990, %v996
        %v1013 = vadd.f32 %v991, %v996
        %v1014 = vmax.f32 %v998, 0.0
        %v1015 = vmax.f32 %v999, 0.0
        %v1016 = vmax.f32 %v1000, 0.0
        %v1017 = vmax.f32 %v1001, 0.0
        %v1018 = vmax.f32 %v1002, 0.0
        %v1019 = vmax.f32 %v1003, 0.0
        %v1020 = vmax.f32 %v1004, 0.0
        %v1021 = vmax.f32 %v1005, 0.0
        %v1022 = vmax.f32 %v1006, 0.0
        %v1023 = vmax.f32 %v1007, 0.0
        %v1024 = vmax.f32 %v1008, 0.0
        %v1025 = vmax.f32 %v1009, 0.0
        %v1026 = vmax.f32 %v1010, 0.0
        %v1027 = vmax.f32 %v1011, 0.0
        %v1028 = vmax.f32 %v1012, 0.0
        %v1029 = vmax.f32 %v1013, 0.0
        %v1030 = vpack.c.bf16 %v1015, %v1014
        %v1031 = vpack.c.bf16 %v1017, %v1016
        %v1032 = vpack.c.bf16 %v1019, %v1018
        %v1033 = vpack.c.bf16 %v1021, %v1020
        %v1034 = vpack.c.bf16 %v1023, %v1022
        %v1035 = vpack.c.bf16 %v1025, %v1024
        %v1036 = vpack.c.bf16 %v1027, %v1026
        %v1037 = vpack.c.bf16 %v1029, %v1028
        %v1039 = vlaneseq
        %v1040 = vshrl.u32 %v1039, 7
        %v1041 = vsub.s32 0, %v1040
        %v1042 = vrot.slane %v492, %v1041
        %v1060 = vunpack.c.l.b16 %v493
        %v1061 = vunpack.c.l.b16 %v494
        %v1062 = vunpack.c.l.b16 %v495
        %v1063 = vunpack.c.l.b16 %v496
        %v1064 = vunpack.c.l.b16 %v497
        %v1065 = vunpack.c.l.b16 %v498
        %v1066 = vunpack.c.l.b16 %v499
        %v1067 = vunpack.c.l.b16 %v500
        %v1068 = vunpack.c.l.b16 %v501
        %v1069 = vunpack.c.l.b16 %v502
        %v1070 = vunpack.c.l.b16 %v503
        %v1071 = vunpack.c.l.b16 %v504
        %v1072 = vunpack.c.l.b16 %v505
        %v1073 = vunpack.c.l.b16 %v506
        %v1074 = vunpack.c.l.b16 %v507
        %v1075 = vunpack.c.l.b16 %v508
        %v1076 = vpack.c.b16 %v1061, %v1060
        %v1077 = vpack.c.b16 %v1063, %v1062
        %v1078 = vpack.c.b16 %v1065, %v1064
        %v1079 = vpack.c.b16 %v1067, %v1066
        %v1080 = vpack.c.b16 %v1069, %v1068
        %v1081 = vpack.c.b16 %v1071, %v1070
        %v1082 = vpack.c.b16 %v1073, %v1072
        %v1083 = vpack.c.b16 %v1075, %v1074
        %1092 = vmatprep.subr.bf16.mxu0 0
        %1093 = vmatpush1.bf16.msra.mxu0 %v1076
        %1094 = vmatprep.subr.bf16.mxu0 0
        %1095 = vmatpush1.bf16.msra.mxu0 %v1077
        %1096 = vmatprep.subr.bf16.mxu0 0
        %1097 = vmatpush1.bf16.msra.mxu0 %v1078
        %1098 = vmatprep.subr.bf16.mxu0 0
        %1099 = vmatpush1.bf16.msra.mxu0 %v1079
        %1100 = vmatprep.subr.bf16.mxu0 0
        %1101 = vmatpush1.bf16.msra.mxu0 %v1080
        %1102 = vmatprep.subr.bf16.mxu0 0
        %1103 = vmatpush1.bf16.msra.mxu0 %v1081
        %1104 = vmatprep.subr.bf16.mxu0 0
        %1105 = vmatpush1.bf16.msra.mxu0 %v1082
        %1106 = vmatprep.subr.bf16.mxu0 0
        %1107 = vmatpush1.bf16.msra.mxu0 %v1083
        %1108 = vmatprep.subr.bf16.mxu0 0
        %1109 = vmatpush1.bf16.msra.mxu0 0
        %1110 = vmatprep.subr.bf16.mxu0 0
        %1111 = vmatpush1.bf16.msra.mxu0 0
        %1112 = vmatprep.subr.bf16.mxu0 0
        %1113 = vmatpush1.bf16.msra.mxu0 0
        %1114 = vmatprep.subr.bf16.mxu0 0
        %1115 = vmatpush1.bf16.msra.mxu0 0
        %1116 = vmatprep.subr.bf16.mxu0 0
        %1117 = vmatpush1.bf16.msra.mxu0 0
        %1118 = vmatprep.subr.bf16.mxu0 0
        %1119 = vmatpush1.bf16.msra.mxu0 0
        %1120 = vmatprep.subr.bf16.mxu0 0
        %1121 = vmatpush1.bf16.msra.mxu0 0
        %1122 = vmatprep.subr.bf16.mxu0 0
        %1123 = vmatpush1.bf16.msra.mxu0 0
        %1124 = vmatprep.mubr.bf16.mxu0 0
        %1125 = vmatmul.mubr.bf16.gmra.mrb[0].mxu0 %v1030
        %v1126 = vpop.f32.mrb[0].mxu0
        %v1127 = vadd.f32 %v1042, %v1126
        %v1128 = vpop.f32.mrb[0].mxu0
        %v1129 = vpop.f32.mrb[0].mxu0
        %v1130 = vadd.f32 %v1042, %v1129
        %v1131 = vpop.f32.mrb[0].mxu0
        %1132 = vmatprep.mubr.bf16.mxu0 0
        %1133 = vmatmul.mubr.bf16.gmra.mrb[0].mxu0 %v1031
        %v1134 = vpop.f32.mrb[0].mxu0
        %v1135 = vadd.f32 %v1042, %v1134
        %v1136 = vpop.f32.mrb[0].mxu0
        %v1137 = vpop.f32.mrb[0].mxu0
        %v1138 = vadd.f32 %v1042, %v1137
        %v1139 = vpop.f32.mrb[0].mxu0
        %1140 = vmatprep.mubr.bf16.mxu0 0
        %1141 = vmatmul.mubr.bf16.gmra.mrb[0].mxu0 %v1032
        %v1142 = vpop.f32.mrb[0].mxu0
        %v1143 = vadd.f32 %v1042, %v1142
        %v1144 = vpop.f32.mrb[0].mxu0
        %v1145 = vpop.f32.mrb[0].mxu0
        %v1146 = vadd.f32 %v1042, %v1145
        %v1147 = vpop.f32.mrb[0].mxu0
        %1148 = vmatprep.mubr.bf16.mxu0 0
        %1149 = vmatmul.mubr.bf16.gmra.mrb[0].mxu0 %v1033
        %v1150 = vpop.f32.mrb[0].mxu0
        %v1151 = vadd.f32 %v1042, %v1150
        %v1152 = vpop.f32.mrb[0].mxu0
        %v1153 = vpop.f32.mrb[0].mxu0
        %v1154 = vadd.f32 %v1042, %v1153
        %v1155 = vpop.f32.mrb[0].mxu0
        %1156 = vmatprep.mubr.bf16.mxu0 0
        %1157 = vmatmul.mubr.bf16.gmra.mrb[0].mxu0 %v1034
        %v1158 = vpop.f32.mrb[0].mxu0
        %v1159 = vadd.f32 %v1042, %v1158
        %v1160 = vpop.f32.mrb[0].mxu0
        %v1161 = vpop.f32.mrb[0].mxu0
        %v1162 = vadd.f32 %v1042, %v1161
        %v1163 = vpop.f32.mrb[0].mxu0
        %1164 = vmatprep.mubr.bf16.mxu0 0
        %1165 = vmatmul.mubr.bf16.gmra.mrb[0].mxu0 %v1035
        %v1166 = vpop.f32.mrb[0].mxu0
        %v1167 = vadd.f32 %v1042, %v1166
        %v1168 = vpop.f32.mrb[0].mxu0
        %v1169 = vpop.f32.mrb[0].mxu0
        %v1170 = vadd.f32 %v1042, %v1169
        %v1171 = vpop.f32.mrb[0].mxu0
        %1172 = vmatprep.mubr.bf16.mxu0 0
        %1173 = vmatmul.mubr.bf16.gmra.mrb[0].mxu0 %v1036
        %v1174 = vpop.f32.mrb[0].mxu0
        %v1175 = vadd.f32 %v1042, %v1174
        %v1176 = vpop.f32.mrb[0].mxu0
        %v1177 = vpop.f32.mrb[0].mxu0
        %v1178 = vadd.f32 %v1042, %v1177
        %v1179 = vpop.f32.mrb[0].mxu0
        %1180 = vmatprep.mubr.bf16.mxu0 0
        %1181 = vmatmul.mubr.bf16.gmra.mrb[0].mxu0 %v1037
        %v1182 = vpop.f32.mrb[0].mxu0
        %v1183 = vadd.f32 %v1042, %v1182
        %v1184 = vpop.f32.mrb[0].mxu0
        %v1185 = vpop.f32.mrb[0].mxu0
        %v1186 = vadd.f32 %v1042, %v1185
        %v1187 = vpop.f32.mrb[0].mxu0
        %1188 = vdwg.mxu0
        %v1189 = vmax.f32 %v1127, 0.0
        %v1190 = vmax.f32 %v1130, 0.0
        %v1191 = vmax.f32 %v1135, 0.0
        %v1192 = vmax.f32 %v1138, 0.0
        %v1193 = vmax.f32 %v1143, 0.0
        %v1194 = vmax.f32 %v1146, 0.0
        %v1195 = vmax.f32 %v1151, 0.0
        %v1196 = vmax.f32 %v1154, 0.0
        %v1197 = vmax.f32 %v1159, 0.0
        %v1198 = vmax.f32 %v1162, 0.0
        %v1199 = vmax.f32 %v1167, 0.0
        %v1200 = vmax.f32 %v1170, 0.0
        %v1201 = vmax.f32 %v1175, 0.0
        %v1202 = vmax.f32 %v1178, 0.0
        %v1203 = vmax.f32 %v1183, 0.0
        %v1204 = vmax.f32 %v1186, 0.0
        %1205 = vst [vmem:[%s190] sm:$0xff] %v1189
        %1206 = vst [vmem:[%s190 + $0x8] sm:$0xff] %v1190
        %1207 = vst [vmem:[%s190 + $0x10] sm:$0xff] %v1191
        %1208 = vst [vmem:[%s190 + $0x18] sm:$0xff] %v1192
        %1209 = vst [vmem:[%s190 + $0x20] sm:$0xff] %v1193
        %1210 = vst [vmem:[%s190 + $0x28] sm:$0xff] %v1194
        %1211 = vst [vmem:[%s190 + $0x30] sm:$0xff] %v1195
        %1212 = vst [vmem:[%s190 + $0x38] sm:$0xff] %v1196
        %1213 = vst [vmem:[%s190 + $0x40] sm:$0xff] %v1197
        %1214 = vst [vmem:[%s190 + $0x48] sm:$0xff] %v1198
        %1215 = vst [vmem:[%s190 + $0x50] sm:$0xff] %v1199
        %1216 = vst [vmem:[%s190 + $0x58] sm:$0xff] %v1200
        %1217 = vst [vmem:[%s190 + $0x60] sm:$0xff] %v1201
        %1218 = vst [vmem:[%s190 + $0x68] sm:$0xff] %v1202
        %1219 = vst [vmem:[%s190 + $0x70] sm:$0xff] %v1203
        %1220 = vst [vmem:[%s190 + $0x78] sm:$0xff] %v1204
        %s1221 = sand.u32 %s125, 1
        %s1222 = scalar_lea.sflag [#allocation5], %s1221
        %s1223 = sand.u32 %s125, 1
        %s1224 = smul.addr %s1223, 128
        %s1225 = scalar_lea.vmem [#allocation4], %s1224
        // Predicated region
        $region119: #{tpu_custom_call.1} parent=35 // pred_check
          %p1226 = pneg %p135
        $region120: #{tpu_custom_call.1} parent=35 // pred_check_branch
          %1228 = sbr.rel (%p1226) target = $region122
        $region121: #{tpu_custom_call.1} parent=35 // pred_region
          %s1229 = smul.u32 8, %s24
          %s1231 = ssub.s32 2048, 2048
          %1232 = vsyncadd %s1222, %s1231
          %s1233 = smul.addr %s1229, 2
          %s1234 = smul.addr %s23, 32
          %s1235 = sadd.s32 %s1233, %s1234
          %s1236 = smul.addr %s1235, 128
          %s1237 = scalar_lea.hbm %s5, %s1236
          %s1238 = sshll.u32 %s1225, 4
          %s1239 = int_to_ptr.vmem [resolvable:$true] %s1238
          %1244 = dma.vmem_to_hbm [thread:$0]  %s1239, 2048, %s1237, %s1222, 128, 128, 8
        $region122: #{tpu_custom_call.1} parent=35 // pred_fallthru
          _
      $region36: #{tpu_custom_call.1} parent=5 // pred_fallthru
        _
      %p1245 = scmp.le.s32.totalorder 2, %s14
      // Predicated region
      $region123: #{tpu_custom_call.1} parent=5 // pred_check
        %p1246 = pneg %p1245
      $region124: #{tpu_custom_call.1} parent=5 // pred_check_branch
        %1248 = sbr.rel (%p1246) target = $region126
      $region125: #{tpu_custom_call.1} parent=5 // pred_region
        %s1249 = ssub.s32 %s14, 2
        // Predicated region
        $region127: #{tpu_custom_call.1} parent=125 // pred_check
          %p1250 = pneg %p141
        $region128: #{tpu_custom_call.1} parent=125 // pred_check_branch
          %1252 = sbr.rel (%p1250) target = $region130
        $region129: #{tpu_custom_call.1} parent=125 // pred_region
          %s1253 = sand.u32 %s126, 1
          %s1254 = scalar_lea.sflag [#allocation5], %s1253
          %s1255 = sand.u32 %s126, 1
          %s1256 = smul.addr %s1255, 128
          %s1257 = scalar_lea.vmem [#allocation4], %s1256
          %1258 = dma.done %s1254, 2048
        $region130: #{tpu_custom_call.1} parent=125 // pred_fallthru
          _
      $region126: #{tpu_custom_call.1} parent=5 // pred_fallthru
        _
    $region6: #{tpu_custom_call.1} parent=1 // loop_footer
      %s18 = sadd.s32 1, %s14
    $region7: #{tpu_custom_call.1} parent=1 // loop_footer_branch
      %13 = sbr.rel target = $region3
    $region8: #{tpu_custom_call.1} parent=1 // loop_exit
      _
    %1259 = vsyncpa [#allocation5], 1
    %s1260 = scalar_lea.sflag [#allocation5], 1
    %1261 = vsyncpa %s1260, 1
  %1262 = vsyncmov [#allocation3]
  %s1263 = vpop.sfrf %1262
  %p1264 = scmp.eq.s32.totalorder %s1263, 0
  %p1265 = pneg %p1264
  %1267 = shalt.err (%p1265)
  %s1268 = scalar_lea.sflag [#allocation3], 1
  %1269 = vsyncmov %s1268
  %s1270 = vpop.sfrf %1269
  %p1271 = scmp.eq.s32.totalorder %s1270, 0
  %p1272 = pneg %p1271
  %1274 = shalt.err (%p1272)

</llo_original>
